<compile_context>
chip_gen: v5e
topology: v5e:2x2
jax: 0.10.0
libtpu: 0.0.40
codegen_flags: <defaults>
</compile_context>

<pallas_src>
import functools

import jax
import jax.numpy as jnp
from jax import lax
from jax.experimental import pallas as pl
from jax.experimental.pallas import tpu as pltpu


# ------------------------------- Pallas kernel ------------------------------- #

def _double_conv_kernel(x_ref, w1_ref, b1_ref, w2_ref, b2_ref, o_ref, y1_ref,
                        *, L1, L2):
    """Fused DoubleConv for one batch item.

    x_ref : (1, Cin, Le)    input, Le = L rounded up to even
    w1_ref: (3, Cmid, Cin)  conv1 weights per tap, BN1 scale folded in
    b1_ref: (Cmid, 1)       conv1 bias + BN1 shift folded
    w2_ref: (3, Cout, Cmid) conv2 weights per tap, BN2 scale folded in
    b2_ref: (Cout, 1)       conv2 bias + BN2 shift folded
    o_ref : (1, Cout, Lp)   output (after MaxPool1d(2))
    y1_ref: (Cmid, L1e)     VMEM scratch holding the stage-1 activation
    """
    cin, le = x_ref.shape[1], x_ref.shape[2]
    cmid, l1e = y1_ref.shape
    cout, lp = o_ref.shape[1], o_ref.shape[2]

    # ---------------- stage 1: Conv1d(k=3, s=2) + folded BN + ReLU ----------------
    # Even/odd de-interleave of the length axis: the three conv taps become
    # contiguous slices, so the conv is three plain MXU matmuls, all in VMEM.
    x = x_ref[0]                                      # (Cin, Le)
    x3 = x.reshape(cin, le // 2, 2)
    xe, xo = x3[:, :, 0], x3[:, :, 1]                 # x[2j], x[2j+1]
    taps = (xe[:, :L1], xo[:, :L1], xe[:, 1:L1 + 1])  # x[2j], x[2j+1], x[2j+2]
    acc = jnp.dot(w1_ref[0], taps[0], preferred_element_type=jnp.float32)
    for k in (1, 2):
        acc += jnp.dot(w1_ref[k], taps[k], preferred_element_type=jnp.float32)
    y1 = jnp.maximum(acc + b1_ref[...], 0.0)          # (Cmid, L1)

    # Stage-1 activation stays resident in VMEM (padded to even length so the
    # stage-2 de-interleave is a cheap trailing reshape); no HBM round trip.
    if l1e != L1:                                     # pad column is never used
        y1_ref[:, L1:] = jnp.zeros((cmid, l1e - L1), jnp.float32)
    y1_ref[:, :L1] = y1

    # ---------------- stage 2: Conv1d(k=3, s=2) + folded BN + ReLU ----------------
    z3 = y1_ref[...].reshape(cmid, l1e // 2, 2)
    ze, zo = z3[:, :, 0], z3[:, :, 1]
    taps2 = (ze[:, :L2], zo[:, :L2], ze[:, 1:L2 + 1])
    acc2 = jnp.dot(w2_ref[0], taps2[0], preferred_element_type=jnp.float32)
    for k in (1, 2):
        acc2 += jnp.dot(w2_ref[k], taps2[k], preferred_element_type=jnp.float32)
    y2 = jnp.maximum(acc2 + b2_ref[...], 0.0)         # (Cout, L2)

    # -------------------------------- MaxPool1d(2) --------------------------------
    y2p = y2[:, :2 * lp].reshape(cout, lp, 2)
    o_ref[0] = jnp.max(y2p, axis=-1)


# ---------------------------------- Wrapper ---------------------------------- #

def _fold_bn_into_conv(w, b, gamma, beta, mean, var, eps):
    # Eval-mode BatchNorm folded into the conv:  y = (W*s) (*) x + ((b - m)*s + beta)
    # TODO(synk): training-mode BN (batch statistics) not implemented; PyTorch
    # eval semantics (running stats) are used.
    s = gamma / jnp.sqrt(var + eps)
    w_taps = jnp.transpose((w * s[:, None, None]).astype(jnp.float32), (2, 0, 1))
    bias = ((b - mean) * s + beta)[:, None].astype(jnp.float32)
    return w_taps, bias                               # (3, Cout, Cin), (Cout, 1)


@jax.jit
def double_conv_forward(x, params):
    eps = 1e-5
    n, cin, L = x.shape
    cmid = params["w1"].shape[0]
    cout = params["w2"].shape[0]

    L1 = (L - 3) // 2 + 1            # conv1 output length
    L2 = (L1 - 3) // 2 + 1           # conv2 output length
    Lp = L2 // 2                     # after MaxPool1d(2) (floor)
    Le = L + (L % 2)                 # pad input length to even (pad never read)
    L1e = L1 + (L1 % 2)              # scratch padded to even for de-interleave
    if Le != L:
        x = jnp.pad(x, ((0, 0), (0, 0), (0, 1)))

    w1, b1 = _fold_bn_into_conv(params["w1"], params["b1"], params["g1"],
                                params["bt1"], params["rm1"], params["rv1"], eps)
    w2, b2 = _fold_bn_into_conv(params["w2"], params["b2"], params["g2"],
                                params["bt2"], params["rm2"], params["rv2"], eps)

    kernel = functools.partial(_double_conv_kernel, L1=L1, L2=L2)
    return pl.pallas_call(
        kernel,
        out_shape=jax.ShapeDtypeStruct((n, cout, Lp), jnp.float32),
        grid=(n,),
        in_specs=[
            pl.BlockSpec((1, cin, Le), lambda i: (i, 0, 0)),
            pl.BlockSpec((3, cmid, cin), lambda i: (0, 0, 0)),
            pl.BlockSpec((cmid, 1), lambda i: (0, 0)),
            pl.BlockSpec((3, cout, cmid), lambda i: (0, 0, 0)),
            pl.BlockSpec((cout, 1), lambda i: (0, 0)),
        ],
        out_specs=pl.BlockSpec((1, cout, Lp), lambda i: (i, 0, 0)),
        scratch_shapes=[pltpu.VMEM((cmid, L1e), jnp.float32)],
        compiler_params=pltpu.CompilerParams(
            dimension_semantics=("parallel",)),
    )(x.astype(jnp.float32), w1, b1, w2, b2)


# ------------------------------ pure-JAX reference ---------------------------- #

def _ref_forward(x, params, eps=1e-5):
    def conv(xx, w, b):
        y = lax.conv_general_dilated(xx, w, (2,), "VALID",
                                     dimension_numbers=("NCH", "OIH", "NCH"))
        return y + b[None, :, None]

    def bn(y, g, bt, m, v):
        return (y - m[None, :, None]) / jnp.sqrt(v[None, :, None] + eps) \
            * g[None, :, None] + bt[None, :, None]

    y = jnp.maximum(bn(conv(x, params["w1"], params["b1"]),
                       params["g1"], params["bt1"],
                       params["rm1"], params["rv1"]), 0.0)
    y = jnp.maximum(bn(conv(y, params["w2"], params["b2"]),
                       params["g2"], params["bt2"],
                       params["rm2"], params["rv2"]), 0.0)
    lp = y.shape[-1] // 2
    return y[:, :, :2 * lp].reshape(y.shape[0], y.shape[1], lp, 2).max(-1)


# ------------------------------------ main ------------------------------------ #

if __name__ == "__main__":
    in_channels, out_channels = 4, 8          # mid_channels defaults to out_channels
    mid_channels = out_channels
    N, L = 2, 64

    ks = jax.random.split(jax.random.PRNGKey(0), 13)
    params = {
        "w1": jax.random.normal(ks[0], (mid_channels, in_channels, 3), jnp.float32) * 0.3,
        "b1": jax.random.normal(ks[1], (mid_channels,), jnp.float32) * 0.1,
        "g1": 1.0 + 0.1 * jax.random.normal(ks[2], (mid_channels,), jnp.float32),
        "bt1": 0.1 * jax.random.normal(ks[3], (mid_channels,), jnp.float32),
        "rm1": 0.1 * jax.random.normal(ks[4], (mid_channels,), jnp.float32),
        "rv1": 1.0 + 0.1 * jnp.abs(jax.random.normal(ks[5], (mid_channels,), jnp.float32)),
        "w2": jax.random.normal(ks[6], (out_channels, mid_channels, 3), jnp.float32) * 0.3,
        "b2": jax.random.normal(ks[7], (out_channels,), jnp.float32) * 0.1,
        "g2": 1.0 + 0.1 * jax.random.normal(ks[8], (out_channels,), jnp.float32),
        "bt2": 0.1 * jax.random.normal(ks[9], (out_channels,), jnp.float32),
        "rm2": 0.1 * jax.random.normal(ks[10], (out_channels,), jnp.float32),
        "rv2": 1.0 + 0.1 * jnp.abs(jax.random.normal(ks[11], (out_channels,), jnp.float32)),
    }
    x = jax.random.normal(ks[12], (N, in_channels, L), jnp.float32)

    out = jax.block_until_ready(double_conv_forward(x, params))
    ref = jax.block_until_ready(_ref_forward(x, params))

    assert out.shape == ref.shape, (out.shape, ref.shape)
    max_err = float(jnp.max(jnp.abs(out - ref)))
    assert jnp.allclose(out, ref, atol=2e-4, rtol=2e-4), max_err
    print("KERNEL_OK")
</pallas_src>

<mosaic_0001>
module attributes {stable_mosaic.version = 11 : i64} {
  func.func @_double_conv_kernel(%arg0: i32, %arg1: memref<1x4x64xf32, #tpu.memory_space<vmem>>, %arg2: memref<3x8x4xf32, #tpu.memory_space<vmem>>, %arg3: memref<8x1xf32, #tpu.memory_space<vmem>>, %arg4: memref<3x8x8xf32, #tpu.memory_space<vmem>>, %arg5: memref<8x1xf32, #tpu.memory_space<vmem>>, %arg6: memref<1x8x7xf32, #tpu.memory_space<vmem>>, %arg7: memref<8x32xf32, #tpu.memory_space<vmem>>) attributes {dimension_semantics = [#tpu.dimension_semantics<parallel>], iteration_bounds = array<i64: 2>, scalar_prefetch = 0 : i64, scratch_operands = 1 : i64, tpu.core_type = #tpu.core_type<tc>, window_params = [{transform_indices = @transform_0, window_bounds = array<i64: 1, 4, 64>}, {pipeline_mode = #tpu.pipeline_mode<synchronous>, transform_indices = @transform_1, window_bounds = array<i64: 3, 8, 4>}, {pipeline_mode = #tpu.pipeline_mode<synchronous>, transform_indices = @transform_2, window_bounds = array<i64: 8, 1>}, {pipeline_mode = #tpu.pipeline_mode<synchronous>, transform_indices = @transform_3, window_bounds = array<i64: 3, 8, 8>}, {pipeline_mode = #tpu.pipeline_mode<synchronous>, transform_indices = @transform_4, window_bounds = array<i64: 8, 1>}, {transform_indices = @transform_5, window_bounds = array<i64: 1, 8, 7>}]} {
    %c0 = arith.constant 0 : index
    %c0_0 = arith.constant 0 : index
    %c0_1 = arith.constant 0 : index
    %0 = vector.load %arg1[%c0, %c0_0, %c0_1] : memref<1x4x64xf32, #tpu.memory_space<vmem>>, vector<1x4x64xf32>
    %1 = vector.shape_cast %0 : vector<1x4x64xf32> to vector<4x64xf32>
    %2 = vector.shape_cast %1 : vector<4x64xf32> to vector<4x32x2xf32>
    %3 = vector.extract_strided_slice %2 {offsets = [0, 0, 0], sizes = [4, 32, 1], strides = [1, 1, 1]} : vector<4x32x2xf32> to vector<4x32x1xf32>
    %4 = vector.shape_cast %3 : vector<4x32x1xf32> to vector<4x32xf32>
    %5 = vector.extract_strided_slice %2 {offsets = [0, 0, 1], sizes = [4, 32, 1], strides = [1, 1, 1]} : vector<4x32x2xf32> to vector<4x32x1xf32>
    %6 = vector.shape_cast %5 : vector<4x32x1xf32> to vector<4x32xf32>
    %7 = vector.extract_strided_slice %4 {offsets = [0, 0], sizes = [4, 31], strides = [1, 1]} : vector<4x32xf32> to vector<4x31xf32>
    %8 = vector.extract_strided_slice %6 {offsets = [0, 0], sizes = [4, 31], strides = [1, 1]} : vector<4x32xf32> to vector<4x31xf32>
    %9 = vector.extract_strided_slice %4 {offsets = [0, 1], sizes = [4, 31], strides = [1, 1]} : vector<4x32xf32> to vector<4x31xf32>
    %c0_2 = arith.constant 0 : index
    %c0_3 = arith.constant 0 : index
    %c0_4 = arith.constant 0 : index
    %10 = vector.load %arg2[%c0_2, %c0_3, %c0_4] : memref<3x8x4xf32, #tpu.memory_space<vmem>>, vector<1x8x4xf32>
    %11 = vector.shape_cast %10 : vector<1x8x4xf32> to vector<8x4xf32>
    %cst = arith.constant dense<0.000000e+00> : vector<8x31xf32>
    %12 = tpu.matmul %11, %7, %cst {dimension_numbers = #tpu.dot_dimension_numbers<[1], [0], [0], [1], [0, 0, 1, 1], [], []>} : vector<8x4xf32>, vector<4x31xf32>, vector<8x31xf32> -> vector<8x31xf32>
    %c1 = arith.constant 1 : index
    %c0_5 = arith.constant 0 : index
    %c0_6 = arith.constant 0 : index
    %13 = vector.load %arg2[%c1, %c0_5, %c0_6] : memref<3x8x4xf32, #tpu.memory_space<vmem>>, vector<1x8x4xf32>
    %14 = vector.shape_cast %13 : vector<1x8x4xf32> to vector<8x4xf32>
    %cst_7 = arith.constant dense<0.000000e+00> : vector<8x31xf32>
    %15 = tpu.matmul %14, %8, %cst_7 {dimension_numbers = #tpu.dot_dimension_numbers<[1], [0], [0], [1], [0, 0, 1, 1], [], []>} : vector<8x4xf32>, vector<4x31xf32>, vector<8x31xf32> -> vector<8x31xf32>
    %16 = arith.addf %12, %15 : vector<8x31xf32>
    %c2 = arith.constant 2 : index
    %c0_8 = arith.constant 0 : index
    %c0_9 = arith.constant 0 : index
    %17 = vector.load %arg2[%c2, %c0_8, %c0_9] : memref<3x8x4xf32, #tpu.memory_space<vmem>>, vector<1x8x4xf32>
    %18 = vector.shape_cast %17 : vector<1x8x4xf32> to vector<8x4xf32>
    %cst_10 = arith.constant dense<0.000000e+00> : vector<8x31xf32>
    %19 = tpu.matmul %18, %9, %cst_10 {dimension_numbers = #tpu.dot_dimension_numbers<[1], [0], [0], [1], [0, 0, 1, 1], [], []>} : vector<8x4xf32>, vector<4x31xf32>, vector<8x31xf32> -> vector<8x31xf32>
    %20 = arith.addf %16, %19 : vector<8x31xf32>
    %c0_11 = arith.constant 0 : index
    %c0_12 = arith.constant 0 : index
    %21 = vector.load %arg3[%c0_11, %c0_12] : memref<8x1xf32, #tpu.memory_space<vmem>>, vector<8x1xf32>
    %22 = vector.broadcast %21 : vector<8x1xf32> to vector<8x31xf32>
    %23 = arith.addf %20, %22 : vector<8x31xf32>
    %cst_13 = arith.constant 0.000000e+00 : f32
    %24 = vector.broadcast %cst_13 : f32 to vector<8x31xf32>
    %25 = arith.maximumf %23, %24 : vector<8x31xf32>
    %cst_14 = arith.constant 0.000000e+00 : f32
    %26 = vector.broadcast %cst_14 : f32 to vector<8x1xf32>
    %c0_15 = arith.constant 0 : index
    %c31 = arith.constant 31 : index
    %27 = vector.load %arg7[%c0_15, %c31] : memref<8x32xf32, #tpu.memory_space<vmem>>, vector<8x1xf32>
    tpu.vector_store %arg7[%c0_15, %c31], %26 {strides = array<i32>} : memref<8x32xf32, #tpu.memory_space<vmem>>, vector<8x1xf32>,
    %c0_16 = arith.constant 0 : index
    %c0_17 = arith.constant 0 : index
    %28 = vector.load %arg7[%c0_16, %c0_17] : memref<8x32xf32, #tpu.memory_space<vmem>>, vector<8x31xf32>
    tpu.vector_store %arg7[%c0_16, %c0_17], %25 {strides = array<i32>} : memref<8x32xf32, #tpu.memory_space<vmem>>, vector<8x31xf32>,
    %c0_18 = arith.constant 0 : index
    %c0_19 = arith.constant 0 : index
    %29 = vector.load %arg7[%c0_18, %c0_19] : memref<8x32xf32, #tpu.memory_space<vmem>>, vector<8x32xf32>
    %30 = vector.shape_cast %29 : vector<8x32xf32> to vector<8x16x2xf32>
    %31 = vector.extract_strided_slice %30 {offsets = [0, 0, 0], sizes = [8, 16, 1], strides = [1, 1, 1]} : vector<8x16x2xf32> to vector<8x16x1xf32>
    %32 = vector.shape_cast %31 : vector<8x16x1xf32> to vector<8x16xf32>
    %33 = vector.extract_strided_slice %30 {offsets = [0, 0, 1], sizes = [8, 16, 1], strides = [1, 1, 1]} : vector<8x16x2xf32> to vector<8x16x1xf32>
    %34 = vector.shape_cast %33 : vector<8x16x1xf32> to vector<8x16xf32>
    %35 = vector.extract_strided_slice %32 {offsets = [0, 0], sizes = [8, 15], strides = [1, 1]} : vector<8x16xf32> to vector<8x15xf32>
    %36 = vector.extract_strided_slice %34 {offsets = [0, 0], sizes = [8, 15], strides = [1, 1]} : vector<8x16xf32> to vector<8x15xf32>
    %37 = vector.extract_strided_slice %32 {offsets = [0, 1], sizes = [8, 15], strides = [1, 1]} : vector<8x16xf32> to vector<8x15xf32>
    %c0_20 = arith.constant 0 : index
    %c0_21 = arith.constant 0 : index
    %c0_22 = arith.constant 0 : index
    %38 = vector.load %arg4[%c0_20, %c0_21, %c0_22] : memref<3x8x8xf32, #tpu.memory_space<vmem>>, vector<1x8x8xf32>
    %39 = vector.shape_cast %38 : vector<1x8x8xf32> to vector<8x8xf32>
    %cst_23 = arith.constant dense<0.000000e+00> : vector<8x15xf32>
    %40 = tpu.matmul %39, %35, %cst_23 {dimension_numbers = #tpu.dot_dimension_numbers<[1], [0], [0], [1], [0, 0, 1, 1], [], []>} : vector<8x8xf32>, vector<8x15xf32>, vector<8x15xf32> -> vector<8x15xf32>
    %c1_24 = arith.constant 1 : index
    %c0_25 = arith.constant 0 : index
    %c0_26 = arith.constant 0 : index
    %41 = vector.load %arg4[%c1_24, %c0_25, %c0_26] : memref<3x8x8xf32, #tpu.memory_space<vmem>>, vector<1x8x8xf32>
    %42 = vector.shape_cast %41 : vector<1x8x8xf32> to vector<8x8xf32>
    %cst_27 = arith.constant dense<0.000000e+00> : vector<8x15xf32>
    %43 = tpu.matmul %42, %36, %cst_27 {dimension_numbers = #tpu.dot_dimension_numbers<[1], [0], [0], [1], [0, 0, 1, 1], [], []>} : vector<8x8xf32>, vector<8x15xf32>, vector<8x15xf32> -> vector<8x15xf32>
    %44 = arith.addf %40, %43 : vector<8x15xf32>
    %c2_28 = arith.constant 2 : index
    %c0_29 = arith.constant 0 : index
    %c0_30 = arith.constant 0 : index
    %45 = vector.load %arg4[%c2_28, %c0_29, %c0_30] : memref<3x8x8xf32, #tpu.memory_space<vmem>>, vector<1x8x8xf32>
    %46 = vector.shape_cast %45 : vector<1x8x8xf32> to vector<8x8xf32>
    %cst_31 = arith.constant dense<0.000000e+00> : vector<8x15xf32>
    %47 = tpu.matmul %46, %37, %cst_31 {dimension_numbers = #tpu.dot_dimension_numbers<[1], [0], [0], [1], [0, 0, 1, 1], [], []>} : vector<8x8xf32>, vector<8x15xf32>, vector<8x15xf32> -> vector<8x15xf32>
    %48 = arith.addf %44, %47 : vector<8x15xf32>
    %c0_32 = arith.constant 0 : index
    %c0_33 = arith.constant 0 : index
    %49 = vector.load %arg5[%c0_32, %c0_33] : memref<8x1xf32, #tpu.memory_space<vmem>>, vector<8x1xf32>
    %50 = vector.broadcast %49 : vector<8x1xf32> to vector<8x15xf32>
    %51 = arith.addf %48, %50 : vector<8x15xf32>
    %cst_34 = arith.constant 0.000000e+00 : f32
    %52 = vector.broadcast %cst_34 : f32 to vector<8x15xf32>
    %53 = arith.maximumf %51, %52 : vector<8x15xf32>
    %54 = vector.extract_strided_slice %53 {offsets = [0, 0], sizes = [8, 14], strides = [1, 1]} : vector<8x15xf32> to vector<8x14xf32>
    %55 = vector.shape_cast %54 : vector<8x14xf32> to vector<8x7x2xf32>
    %cst_35 = arith.constant dense<0xFF800000> : vector<8x7xf32>
    %56 = vector.multi_reduction <maximumf>, %55, %cst_35 [2] : vector<8x7x2xf32> to vector<8x7xf32>
    %c0_36 = arith.constant 0 : index
    %c0_37 = arith.constant 0 : index
    %c0_38 = arith.constant 0 : index
    %57 = vector.load %arg6[%c0_36, %c0_37, %c0_38] : memref<1x8x7xf32, #tpu.memory_space<vmem>>, vector<1x8x7xf32>
    %58 = vector.shape_cast %57 : vector<1x8x7xf32> to vector<8x7xf32>
    %59 = vector.shape_cast %56 : vector<8x7xf32> to vector<1x8x7xf32>
    tpu.vector_store %arg6[%c0_36, %c0_37, %c0_38], %59 {strides = array<i32>} : memref<1x8x7xf32, #tpu.memory_space<vmem>>, vector<1x8x7xf32>,
    return
  }
  func.func @transform_0(%arg0: i32) -> (i32, i32, i32) {
    %c0_i32 = arith.constant 0 : i32
    %c0_i32_0 = arith.constant 0 : i32
    %c0_i32_1 = arith.constant 0 : i32
    return %arg0, %c0_i32, %c0_i32_0 : i32, i32, i32
  }
  func.func @transform_1(%arg0: i32) -> (i32, i32, i32) {
    %c0_i32 = arith.constant 0 : i32
    %c0_i32_0 = arith.constant 0 : i32
    %c0_i32_1 = arith.constant 0 : i32
    %c0_i32_2 = arith.constant 0 : i32
    return %c0_i32, %c0_i32_0, %c0_i32_1 : i32, i32, i32
  }
  func.func @transform_2(%arg0: i32) -> (i32, i32) {
    %c0_i32 = arith.constant 0 : i32
    %c0_i32_0 = arith.constant 0 : i32
    %c0_i32_1 = arith.constant 0 : i32
    return %c0_i32, %c0_i32_0 : i32, i32
  }
  func.func @transform_3(%arg0: i32) -> (i32, i32, i32) {
    %c0_i32 = arith.constant 0 : i32
    %c0_i32_0 = arith.constant 0 : i32
    %c0_i32_1 = arith.constant 0 : i32
    %c0_i32_2 = arith.constant 0 : i32
    return %c0_i32, %c0_i32_0, %c0_i32_1 : i32, i32, i32
  }
  func.func @transform_4(%arg0: i32) -> (i32, i32) {
    %c0_i32 = arith.constant 0 : i32
    %c0_i32_0 = arith.constant 0 : i32
    %c0_i32_1 = arith.constant 0 : i32
    return %c0_i32, %c0_i32_0 : i32, i32
  }
  func.func @transform_5(%arg0: i32) -> (i32, i32, i32) {
    %c0_i32 = arith.constant 0 : i32
    %c0_i32_0 = arith.constant 0 : i32
    %c0_i32_1 = arith.constant 0 : i32
    return %arg0, %c0_i32, %c0_i32_0 : i32, i32, i32
  }
}

</mosaic_0001>

<llo_original>
// kernel: double_conv_forward.1
$region0: #{double_conv_forward.1}
  #allocation0 [shape = 'u32[]', space=smem, size = 0x4, offset = 0x4, fixed_abs, tag = 'smem constant byte address 0x4 - core index']
  #allocation1 [shape = 'u32[72,128]{1,0:T(1,128)}', space=vmem, size = 0x9000, scoped, tag = 'internal scratch']
  #allocation2 [shape = 'f32[8,32]{1,0:T(8,128)}', space=vmem, size = 0x1000, scoped, tag = 'scratch operand']
  %s0 = inlined_call_operand.vmem [shape: f32[2,4,64], index: 0, kind: input, shape index: {}]
  %s1 = inlined_call_operand.vmem [shape: f32[3,8,4], index: 1, kind: input, shape index: {}]
  %s2 = inlined_call_operand.vmem [shape: f32[8,1], index: 2, kind: input, shape index: {}]
  %s3 = inlined_call_operand.vmem [shape: f32[3,8,8], index: 3, kind: input, shape index: {}]
  %s4 = inlined_call_operand.vmem [shape: f32[8,1], index: 4, kind: input, shape index: {}]
  %s5 = inlined_call_operand.vmem [shape: f32[2,8,7], index: 5, kind: output, shape index: {}]
  %s6 = sld [smem:[#allocation0]]
  $region53: #{double_conv_forward.1} parent=0
    _
  %s8 = ssub.s32 1, %s6
  %s9 = scalar_select 0, %s8, %s6
  loop: start=0, step=1, limit=4
  $region2: #{double_conv_forward.1} parent=0 // loop_pre_header
    _
  $region3: #{double_conv_forward.1} parent=0 // loop_header
    %s11 = sphi 0, %s15
    %p12 = scmp.ge.s32.totalorder %s11, 4
    %s21 = sphi 0, %s23
    %s24 = sphi 0, %s21
    %s25 = sphi 0, %s24
    %s41 = sphi 0, %s25
    %s45 = sphi 0, %s45
    %s47 = sphi 0, %s45
    %s48 = sphi 0, %s47
    %s62 = sphi 0, %s48
    %s66 = sphi 0, %s66
    %s68 = sphi 0, %s66
    %s69 = sphi 0, %s68
    %s83 = sphi 0, %s69
    %s87 = sphi 0, %s87
    %s89 = sphi 0, %s87
    %s90 = sphi 0, %s89
    %s104 = sphi 0, %s90
    %s108 = sphi 0, %s108
    %s110 = sphi 0, %s108
    %s111 = sphi 0, %s110
    %s125 = sphi 0, %s111
    %s131 = sphi 0, %s133
    %s134 = sphi 0, %s131
    %s135 = sphi 0, %s134
    %s151 = sphi 0, %s135
  $region4: #{double_conv_forward.1} parent=0 // loop_header_branch
    %14 = sbr.rel (%p12) target = $region8
  $region5: #{double_conv_forward.1} parent=0 // loop_body
    %s16 = ssub.s32 %s11, 1
    %s17 = ssub.s32 %s11, 2
    %s18 = sadd.s32 %s11, 1
    %s19 = ssub.s32 %s11, %s18
    %p20 = scmp.eq.s32.totalorder %s19, 0
    %s22 = sadd.s32 %s21, 1
    %s23 = scalar_select %p20, %s21, %s22
    %p26 = pneg %p20
    %p27 = scmp.eq.s32.totalorder %s11, 1
    %p28 = por %p26, %p27
    %p29 = scmp.ne.s32.totalorder %s21, %s24
    %p30 = scmp.eq.s32.totalorder %s11, 0
    %p31 = por %p29, %p30
    %p32 = scmp.ne.s32.totalorder %s21, %s24
    %p33 = scmp.eq.s32.totalorder %s16, 1
    %p34 = por %p32, %p33
    %p35 = scmp.ne.s32.totalorder %s24, %s25
    %p36 = scmp.eq.s32.totalorder %s16, 0
    %p37 = por %p35, %p36
    %p38 = scmp.ne.s32.totalorder %s24, %s25
    %p39 = scmp.eq.s32.totalorder %s17, 1
    %p40 = por %p38, %p39
    %p42 = scmp.ne.s32.totalorder %s25, %s41
    %p43 = scmp.eq.s32.totalorder %s17, 0
    %p44 = por %p42, %p43
    %s46 = sadd.s32 %s45, 1
    %p49 = scmp.eq.s32.totalorder %s11, 1
    %p50 = scmp.ne.s32.totalorder %s45, %s47
    %p51 = scmp.eq.s32.totalorder %s11, 0
    %p52 = por %p50, %p51
    %p53 = scmp.ne.s32.totalorder %s45, %s47
    %p54 = scmp.eq.s32.totalorder %s16, 1
    %p55 = por %p53, %p54
    %p56 = scmp.ne.s32.totalorder %s47, %s48
    %p57 = scmp.eq.s32.totalorder %s16, 0
    %p58 = por %p56, %p57
    %p59 = scmp.ne.s32.totalorder %s47, %s48
    %p60 = scmp.eq.s32.totalorder %s17, 1
    %p61 = por %p59, %p60
    %p63 = scmp.ne.s32.totalorder %s48, %s62
    %p64 = scmp.eq.s32.totalorder %s17, 0
    %p65 = por %p63, %p64
    %s67 = sadd.s32 %s66, 1
    %p70 = scmp.eq.s32.totalorder %s11, 1
    %p71 = scmp.ne.s32.totalorder %s66, %s68
    %p72 = scmp.eq.s32.totalorder %s11, 0
    %p73 = por %p71, %p72
    %p74 = scmp.ne.s32.totalorder %s66, %s68
    %p75 = scmp.eq.s32.totalorder %s16, 1
    %p76 = por %p74, %p75
    %p77 = scmp.ne.s32.totalorder %s68, %s69
    %p78 = scmp.eq.s32.totalorder %s16, 0
    %p79 = por %p77, %p78
    %p80 = scmp.ne.s32.totalorder %s68, %s69
    %p81 = scmp.eq.s32.totalorder %s17, 1
    %p82 = por %p80, %p81
    %p84 = scmp.ne.s32.totalorder %s69, %s83
    %p85 = scmp.eq.s32.totalorder %s17, 0
    %p86 = por %p84, %p85
    %s88 = sadd.s32 %s87, 1
    %p91 = scmp.eq.s32.totalorder %s11, 1
    %p92 = scmp.ne.s32.totalorder %s87, %s89
    %p93 = scmp.eq.s32.totalorder %s11, 0
    %p94 = por %p92, %p93
    %p95 = scmp.ne.s32.totalorder %s87, %s89
    %p96 = scmp.eq.s32.totalorder %s16, 1
    %p97 = por %p95, %p96
    %p98 = scmp.ne.s32.totalorder %s89, %s90
    %p99 = scmp.eq.s32.totalorder %s16, 0
    %p100 = por %p98, %p99
    %p101 = scmp.ne.s32.totalorder %s89, %s90
    %p102 = scmp.eq.s32.totalorder %s17, 1
    %p103 = por %p101, %p102
    %p105 = scmp.ne.s32.totalorder %s90, %s104
    %p106 = scmp.eq.s32.totalorder %s17, 0
    %p107 = por %p105, %p106
    %s109 = sadd.s32 %s108, 1
    %p112 = scmp.eq.s32.totalorder %s11, 1
    %p113 = scmp.ne.s32.totalorder %s108, %s110
    %p114 = scmp.eq.s32.totalorder %s11, 0
    %p115 = por %p113, %p114
    %p116 = scmp.ne.s32.totalorder %s108, %s110
    %p117 = scmp.eq.s32.totalorder %s16, 1
    %p118 = por %p116, %p117
    %p119 = scmp.ne.s32.totalorder %s110, %s111
    %p120 = scmp.eq.s32.totalorder %s16, 0
    %p121 = por %p119, %p120
    %p122 = scmp.ne.s32.totalorder %s110, %s111
    %p123 = scmp.eq.s32.totalorder %s17, 1
    %p124 = por %p122, %p123
    %p126 = scmp.ne.s32.totalorder %s111, %s125
    %p127 = scmp.eq.s32.totalorder %s17, 0
    %p128 = por %p126, %p127
    %s129 = ssub.s32 %s11, %s18
    %p130 = scmp.eq.s32.totalorder %s129, 0
    %s132 = sadd.s32 %s131, 1
    %s133 = scalar_select %p130, %s131, %s132
    %p136 = pneg %p130
    %p137 = scmp.eq.s32.totalorder %s11, 1
    %p138 = por %p136, %p137
    %p139 = scmp.ne.s32.totalorder %s131, %s134
    %p140 = scmp.eq.s32.totalorder %s11, 0
    %p141 = por %p139, %p140
    %p142 = scmp.ne.s32.totalorder %s131, %s134
    %p143 = scmp.eq.s32.totalorder %s16, 1
    %p144 = por %p142, %p143
    %p145 = scmp.ne.s32.totalorder %s134, %s135
    %p146 = scmp.eq.s32.totalorder %s16, 0
    %p147 = por %p145, %p146
    %p148 = scmp.ne.s32.totalorder %s134, %s135
    %p149 = scmp.eq.s32.totalorder %s17, 1
    %p150 = por %p148, %p149
    %p152 = scmp.ne.s32.totalorder %s135, %s151
    %p153 = scmp.eq.s32.totalorder %s17, 0
    %p154 = por %p152, %p153
    %p155 = scmp.le.s32.totalorder 1, %s11
    %p156 = scmp.lt.s32.totalorder %s11, 3
    %p157 = pnand %p155, %p156
    %p158 = pneg %p157
    // Predicated region
    $region9: #{double_conv_forward.1} parent=5 // pred_check
      _
    $region10: #{double_conv_forward.1} parent=5 // pred_check_branch
      %160 = sbr.rel (%p157) target = $region12
    $region11: #{double_conv_forward.1} parent=5 // pred_region
      %s161 = ssub.s32 %s11, 1
      // Predicated region
      $region13: #{double_conv_forward.1} parent=11 // pred_check
        %p162 = pneg %p58
      $region14: #{double_conv_forward.1} parent=11 // pred_check_branch
        %164 = sbr.rel (%p162) target = $region16
      $region15: #{double_conv_forward.1} parent=11 // pred_region
        _
      $region16: #{double_conv_forward.1} parent=11 // pred_fallthru
        _
      // Predicated region
      $region17: #{double_conv_forward.1} parent=11 // pred_check
        %p165 = pneg %p79
      $region18: #{double_conv_forward.1} parent=11 // pred_check_branch
        %167 = sbr.rel (%p165) target = $region20
      $region19: #{double_conv_forward.1} parent=11 // pred_region
        _
      $region20: #{double_conv_forward.1} parent=11 // pred_fallthru
        _
      // Predicated region
      $region21: #{double_conv_forward.1} parent=11 // pred_check
        %p168 = pneg %p100
      $region22: #{double_conv_forward.1} parent=11 // pred_check_branch
        %170 = sbr.rel (%p168) target = $region24
      $region23: #{double_conv_forward.1} parent=11 // pred_region
        _
      $region24: #{double_conv_forward.1} parent=11 // pred_fallthru
        _
      // Predicated region
      $region25: #{double_conv_forward.1} parent=11 // pred_check
        %p171 = pneg %p121
      $region26: #{double_conv_forward.1} parent=11 // pred_check_branch
        %173 = sbr.rel (%p171) target = $region28
      $region27: #{double_conv_forward.1} parent=11 // pred_region
        _
      $region28: #{double_conv_forward.1} parent=11 // pred_fallthru
        _
    $region12: #{double_conv_forward.1} parent=5 // pred_fallthru
      _
    %p174 = scmp.lt.s32.totalorder %s11, 2
    // Predicated region
    $region29: #{double_conv_forward.1} parent=5 // pred_check
      %p175 = pneg %p174
    $region30: #{double_conv_forward.1} parent=5 // pred_check_branch
      %177 = sbr.rel (%p175) target = $region32
    $region31: #{double_conv_forward.1} parent=5 // pred_region
      // Predicated region
      $region33: #{double_conv_forward.1} parent=31 // pred_check
        %p178 = pneg %p31
      $region34: #{double_conv_forward.1} parent=31 // pred_check_branch
        %180 = sbr.rel (%p178) target = $region36
      $region35: #{double_conv_forward.1} parent=31 // pred_region
        %p181 = scmp.lt.s32.totalorder %s11, 1
        %s182 = scalar_select %p181, %s11, 1
        %s183 = smul.addr %s182, 4
        %s184 = scalar_lea.vmem %s0, %s183
      $region36: #{double_conv_forward.1} parent=31 // pred_fallthru
        _
    $region32: #{double_conv_forward.1} parent=5 // pred_fallthru
      _
    %p185 = scmp.le.s32.totalorder 1, %s11
    %p186 = scmp.lt.s32.totalorder %s11, 3
    %p187 = pnand %p185, %p186
    %p188 = pneg %p187
    // Predicated region
    $region37: #{double_conv_forward.1} parent=5 // pred_check
      _
    $region38: #{double_conv_forward.1} parent=5 // pred_check_branch
      %190 = sbr.rel (%p187) target = $region40
    $region39: #{double_conv_forward.1} parent=5 // pred_region
      %s191 = ssub.s32 %s11, 1
      %p192 = scmp.lt.s32.totalorder %s16, 1
      %s193 = scalar_select %p192, %s16, 1
      %s194 = smul.addr %s193, 4
      %s195 = scalar_lea.vmem %s0, %s194
      %p196 = pneg %p37
      %p197 = pneg %p34
      %p198 = pneg %p58
      %p199 = pneg %p55
      %p200 = pneg %p79
      %p201 = pneg %p76
      %p202 = pneg %p100
      %p203 = pneg %p97
      %p204 = pneg %p121
      %p205 = pneg %p118
      %p206 = pneg %p147
      %p207 = pneg %p144
      %p208 = scmp.lt.s32.totalorder %s16, 1
      %s209 = scalar_select %p208, %s16, 1
      %s210 = smul.addr %s209, 8
      %s211 = scalar_lea.vmem %s5, %s210
      %p212 = scmp.lt.s32.totalorder %s16, 1
      %s213 = scalar_select %p212, %s16, 1
      %s214 = smul.addr %s213, 4
      %s215 = scalar_lea.vmem %s0, %s214
      %p216 = scmp.lt.s32.totalorder %s16, 1
      %s217 = scalar_select %p216, %s16, 1
      %s218 = smul.addr %s217, 8
      %s219 = scalar_lea.vmem %s5, %s218
      %v220 = vld [vmem:[%s215] sm:$0xf]
      %222 = vrot.lane.b32.xlu0 %v220, 126
      %v223 = vpop.permute.xlu0 %222
      %225 = vrot.lane.b32.xlu0 %v220, 124
      %v226 = vpop.permute.xlu0 %225
      %228 = vrot.lane.b32.xlu0 %v220, 122
      %v229 = vpop.permute.xlu0 %228
      %231 = vrot.lane.b32.xlu0 %v220, 120
      %v232 = vpop.permute.xlu0 %231
      %234 = vrot.lane.b32.xlu0 %v220, 118
      %v235 = vpop.permute.xlu0 %234
      %237 = vrot.lane.b32.xlu0 %v220, 116
      %v238 = vpop.permute.xlu0 %237
      %240 = vrot.lane.b32.xlu0 %v220, 114
      %v241 = vpop.permute.xlu0 %240
      %243 = vrot.lane.b32.xlu0 %v220, 112
      %v244 = vpop.permute.xlu0 %243
      %246 = vrot.lane.b32.xlu0 %v220, 110
      %v247 = vpop.permute.xlu0 %246
      %249 = vrot.lane.b32.xlu0 %v220, 108
      %v250 = vpop.permute.xlu0 %249
      %252 = vrot.lane.b32.xlu0 %v220, 106
      %v253 = vpop.permute.xlu0 %252
      %255 = vrot.lane.b32.xlu0 %v220, 104
      %v256 = vpop.permute.xlu0 %255
      %258 = vrot.lane.b32.xlu0 %v220, 102
      %v259 = vpop.permute.xlu0 %258
      %261 = vrot.lane.b32.xlu0 %v220, 100
      %v262 = vpop.permute.xlu0 %261
      %264 = vrot.lane.b32.xlu0 %v220, 98
      %v265 = vpop.permute.xlu0 %264
      %267 = vrot.lane.b32.xlu0 %v220, 96
      %v268 = vpop.permute.xlu0 %267
      %270 = vrot.lane.b32.xlu0 %v220, 94
      %v271 = vpop.permute.xlu0 %270
      %273 = vrot.lane.b32.xlu0 %v220, 92
      %v274 = vpop.permute.xlu0 %273
      %276 = vrot.lane.b32.xlu0 %v220, 90
      %v277 = vpop.permute.xlu0 %276
      %279 = vrot.lane.b32.xlu0 %v220, 88
      %v280 = vpop.permute.xlu0 %279
      %282 = vrot.lane.b32.xlu0 %v220, 86
      %v283 = vpop.permute.xlu0 %282
      %285 = vrot.lane.b32.xlu0 %v220, 84
      %v286 = vpop.permute.xlu0 %285
      %288 = vrot.lane.b32.xlu0 %v220, 82
      %v289 = vpop.permute.xlu0 %288
      %291 = vrot.lane.b32.xlu0 %v220, 80
      %v292 = vpop.permute.xlu0 %291
      %294 = vrot.lane.b32.xlu0 %v220, 78
      %v295 = vpop.permute.xlu0 %294
      %297 = vrot.lane.b32.xlu0 %v220, 76
      %v298 = vpop.permute.xlu0 %297
      %300 = vrot.lane.b32.xlu0 %v220, 74
      %v301 = vpop.permute.xlu0 %300
      %303 = vrot.lane.b32.xlu0 %v220, 72
      %v304 = vpop.permute.xlu0 %303
      %306 = vrot.lane.b32.xlu0 %v220, 70
      %v307 = vpop.permute.xlu0 %306
      %309 = vrot.lane.b32.xlu0 %v220, 68
      %v310 = vpop.permute.xlu0 %309
      %312 = vrot.lane.b32.xlu0 %v220, 66
      %v313 = vpop.permute.xlu0 %312
      %v315 = vrot.slane %v226, 4
      %vm316 = vcmask 1047556
      %v317 = vsel %vm316, %v315, %v220
      %v319 = vunpack.c.l.s4 1983009808
      %v320 = vunpack.c.0.s8 %v319
      %v321 = vperm.slane %v317, %v320
      %v322 = vrot.slane %v229, 4
      %v323 = vsel %vm316, %v322, %v223
      %v325 = vunpack.c.l.s4 1983009808
      %v326 = vunpack.c.0.s8 %v325
      %v327 = vperm.slane %v323, %v326
      %v328 = vrot.slane %v238, 4
      %v329 = vsel %vm316, %v328, %v232
      %v331 = vunpack.c.l.s4 1983009808
      %v332 = vunpack.c.0.s8 %v331
      %v333 = vperm.slane %v329, %v332
      %v334 = vrot.slane %v241, 4
      %v335 = vsel %vm316, %v334, %v235
      %v337 = vunpack.c.l.s4 1983009808
      %v338 = vunpack.c.0.s8 %v337
      %v339 = vperm.slane %v335, %v338
      %v340 = vrot.slane %v327, 4
      %v341 = vsel %vm316, %v340, %v321
      %v342 = vrot.slane %v321, 4
      %v343 = vsel %vm316, %v327, %v342
      %v345 = vunpack.c.l.s4 1934713408
      %v346 = vunpack.c.0.s8 %v345
      %v347 = vperm.slane %v341, %v346
      %v349 = vunpack.c.l.s4 1934713408
      %v350 = vunpack.c.0.s8 %v349
      %v351 = vperm.slane %v343, %v350
      %v352 = vrot.slane %v339, 4
      %v353 = vsel %vm316, %v352, %v333
      %v354 = vrot.slane %v333, 4
      %v355 = vsel %vm316, %v339, %v354
      %v357 = vunpack.c.l.s4 1934713408
      %v358 = vunpack.c.0.s8 %v357
      %v359 = vperm.slane %v353, %v358
      %v361 = vunpack.c.l.s4 1934713408
      %v362 = vunpack.c.0.s8 %v361
      %v363 = vperm.slane %v355, %v362
      %v364 = vrot.slane %v359, 4
      %v365 = vsel %vm316, %v364, %v347
      %v366 = vrot.slane %v347, 4
      %v367 = vsel %vm316, %v359, %v366
      %v368 = vrot.slane %v363, 4
      %v369 = vsel %vm316, %v368, %v351
      %v370 = vrot.slane %v351, 4
      %v371 = vsel %vm316, %v363, %v370
      %v372 = vrot.slane %v250, 4
      %v373 = vsel %vm316, %v372, %v244
      %v375 = vunpack.c.l.s4 1983009808
      %v376 = vunpack.c.0.s8 %v375
      %v377 = vperm.slane %v373, %v376
      %v378 = vrot.slane %v253, 4
      %v379 = vsel %vm316, %v378, %v247
      %v381 = vunpack.c.l.s4 1983009808
      %v382 = vunpack.c.0.s8 %v381
      %v383 = vperm.slane %v379, %v382
      %v384 = vrot.slane %v262, 4
      %v385 = vsel %vm316, %v384, %v256
      %v387 = vunpack.c.l.s4 1983009808
      %v388 = vunpack.c.0.s8 %v387
      %v389 = vperm.slane %v385, %v388
      %v390 = vrot.slane %v265, 4
      %v391 = vsel %vm316, %v390, %v259
      %v393 = vunpack.c.l.s4 1983009808
      %v394 = vunpack.c.0.s8 %v393
      %v395 = vperm.slane %v391, %v394
      %v396 = vrot.slane %v383, 4
      %v397 = vsel %vm316, %v396, %v377
      %v398 = vrot.slane %v377, 4
      %v399 = vsel %vm316, %v383, %v398
      %v401 = vunpack.c.l.s4 1934713408
      %v402 = vunpack.c.0.s8 %v401
      %v403 = vperm.slane %v397, %v402
      %v405 = vunpack.c.l.s4 1934713408
      %v406 = vunpack.c.0.s8 %v405
      %v407 = vperm.slane %v399, %v406
      %v408 = vrot.slane %v395, 4
      %v409 = vsel %vm316, %v408, %v389
      %v410 = vrot.slane %v389, 4
      %v411 = vsel %vm316, %v395, %v410
      %v413 = vunpack.c.l.s4 1934713408
      %v414 = vunpack.c.0.s8 %v413
      %v415 = vperm.slane %v409, %v414
      %v417 = vunpack.c.l.s4 1934713408
      %v418 = vunpack.c.0.s8 %v417
      %v419 = vperm.slane %v411, %v418
      %v420 = vrot.slane %v415, 4
      %v421 = vsel %vm316, %v420, %v403
      %v422 = vrot.slane %v403, 4
      %v423 = vsel %vm316, %v415, %v422
      %v424 = vrot.slane %v419, 4
      %v425 = vsel %vm316, %v424, %v407
      %v426 = vrot.slane %v407, 4
      %v427 = vsel %vm316, %v419, %v426
      %v428 = vrot.slane %v274, 4
      %v429 = vsel %vm316, %v428, %v268
      %v431 = vunpack.c.l.s4 1983009808
      %v432 = vunpack.c.0.s8 %v431
      %v433 = vperm.slane %v429, %v432
      %v434 = vrot.slane %v277, 4
      %v435 = vsel %vm316, %v434, %v271
      %v437 = vunpack.c.l.s4 1983009808
      %v438 = vunpack.c.0.s8 %v437
      %v439 = vperm.slane %v435, %v438
      %v440 = vrot.slane %v286, 4
      %v441 = vsel %vm316, %v440, %v280
      %v443 = vunpack.c.l.s4 1983009808
      %v444 = vunpack.c.0.s8 %v443
      %v445 = vperm.slane %v441, %v444
      %v446 = vrot.slane %v289, 4
      %v447 = vsel %vm316, %v446, %v283
      %v449 = vunpack.c.l.s4 1983009808
      %v450 = vunpack.c.0.s8 %v449
      %v451 = vperm.slane %v447, %v450
      %v452 = vrot.slane %v439, 4
      %v453 = vsel %vm316, %v452, %v433
      %v454 = vrot.slane %v433, 4
      %v455 = vsel %vm316, %v439, %v454
      %v457 = vunpack.c.l.s4 1934713408
      %v458 = vunpack.c.0.s8 %v457
      %v459 = vperm.slane %v453, %v458
      %v461 = vunpack.c.l.s4 1934713408
      %v462 = vunpack.c.0.s8 %v461
      %v463 = vperm.slane %v455, %v462
      %v464 = vrot.slane %v451, 4
      %v465 = vsel %vm316, %v464, %v445
      %v466 = vrot.slane %v445, 4
      %v467 = vsel %vm316, %v451, %v466
      %v469 = vunpack.c.l.s4 1934713408
      %v470 = vunpack.c.0.s8 %v469
      %v471 = vperm.slane %v465, %v470
      %v473 = vunpack.c.l.s4 1934713408
      %v474 = vunpack.c.0.s8 %v473
      %v475 = vperm.slane %v467, %v474
      %v476 = vrot.slane %v471, 4
      %v477 = vsel %vm316, %v476, %v459
      %v478 = vrot.slane %v459, 4
      %v479 = vsel %vm316, %v471, %v478
      %v480 = vrot.slane %v475, 4
      %v481 = vsel %vm316, %v480, %v463
      %v482 = vrot.slane %v463, 4
      %v483 = vsel %vm316, %v475, %v482
      %v484 = vrot.slane %v298, 4
      %v485 = vsel %vm316, %v484, %v292
      %v487 = vunpack.c.l.s4 1983009808
      %v488 = vunpack.c.0.s8 %v487
      %v489 = vperm.slane %v485, %v488
      %v490 = vrot.slane %v301, 4
      %v491 = vsel %vm316, %v490, %v295
      %v493 = vunpack.c.l.s4 1983009808
      %v494 = vunpack.c.0.s8 %v493
      %v495 = vperm.slane %v491, %v494
      %v496 = vrot.slane %v310, 4
      %v497 = vsel %vm316, %v496, %v304
      %v499 = vunpack.c.l.s4 1983009808
      %v500 = vunpack.c.0.s8 %v499
      %v501 = vperm.slane %v497, %v500
      %v502 = vrot.slane %v313, 4
      %v503 = vsel %vm316, %v502, %v307
      %v505 = vunpack.c.l.s4 1983009808
      %v506 = vunpack.c.0.s8 %v505
      %v507 = vperm.slane %v503, %v506
      %v508 = vrot.slane %v495, 4
      %v509 = vsel %vm316, %v508, %v489
      %v510 = vrot.slane %v489, 4
      %v511 = vsel %vm316, %v495, %v510
      %v513 = vunpack.c.l.s4 1934713408
      %v514 = vunpack.c.0.s8 %v513
      %v515 = vperm.slane %v509, %v514
      %v517 = vunpack.c.l.s4 1934713408
      %v518 = vunpack.c.0.s8 %v517
      %v519 = vperm.slane %v511, %v518
      %v520 = vrot.slane %v507, 4
      %v521 = vsel %vm316, %v520, %v501
      %v522 = vrot.slane %v501, 4
      %v523 = vsel %vm316, %v507, %v522
      %v525 = vunpack.c.l.s4 1934713408
      %v526 = vunpack.c.0.s8 %v525
      %v527 = vperm.slane %v521, %v526
      %v529 = vunpack.c.l.s4 1934713408
      %v530 = vunpack.c.0.s8 %v529
      %v531 = vperm.slane %v523, %v530
      %v532 = vrot.slane %v527, 4
      %v533 = vsel %vm316, %v532, %v515
      %v534 = vrot.slane %v515, 4
      %v535 = vsel %vm316, %v527, %v534
      %v536 = vrot.slane %v531, 4
      %v537 = vsel %vm316, %v536, %v519
      %v538 = vrot.slane %v519, 4
      %v539 = vsel %vm316, %v531, %v538
      %v540 = vld [vmem:[%s1] sm:$0xff]
      %s541 = scalar_lea.vmem %s1, 8
      %v542 = vld [vmem:[%s541] sm:$0xff]
      %559 = vset.pattern.permute.xlu0 1
      %560 = vperm.xlu0 %559, %v365
      %v561 = vpop.permute.xlu0 %560
      %562 = vset.pattern.permute.xlu0 1
      %563 = vperm.xlu0 %562, %v421
      %v564 = vpop.permute.xlu0 %563
      %565 = vset.pattern.permute.xlu0 1
      %566 = vperm.xlu0 %565, %v477
      %v567 = vpop.permute.xlu0 %566
      %568 = vset.pattern.permute.xlu0 1
      %569 = vperm.xlu0 %568, %v533
      %v570 = vpop.permute.xlu0 %569
      %571 = vset.pattern.permute.xlu0 1
      %572 = vperm.xlu0 %571, %v367
      %v573 = vpop.permute.xlu0 %572
      %574 = vset.pattern.permute.xlu0 1
      %575 = vperm.xlu0 %574, %v423
      %v576 = vpop.permute.xlu0 %575
      %577 = vset.pattern.permute.xlu0 1
      %578 = vperm.xlu0 %577, %v479
      %v579 = vpop.permute.xlu0 %578
      %580 = vset.pattern.permute.xlu0 1
      %581 = vperm.xlu0 %580, %v535
      %v582 = vpop.permute.xlu0 %581
      %583 = vset.pattern.permute.xlu0 1
      %584 = vperm.xlu0 %583, %v369
      %v585 = vpop.permute.xlu0 %584
      %586 = vset.pattern.permute.xlu0 1
      %587 = vperm.xlu0 %586, %v425
      %v588 = vpop.permute.xlu0 %587
      %589 = vset.pattern.permute.xlu0 1
      %590 = vperm.xlu0 %589, %v481
      %v591 = vpop.permute.xlu0 %590
      %592 = vset.pattern.permute.xlu0 1
      %593 = vperm.xlu0 %592, %v537
      %v594 = vpop.permute.xlu0 %593
      %595 = vset.pattern.permute.xlu0 1
      %596 = vperm.xlu0 %595, %v371
      %v597 = vpop.permute.xlu0 %596
      %598 = vset.pattern.permute.xlu0 1
      %599 = vperm.xlu0 %598, %v427
      %v600 = vpop.permute.xlu0 %599
      %601 = vset.pattern.permute.xlu0 1
      %602 = vperm.xlu0 %601, %v483
      %v603 = vpop.permute.xlu0 %602
      %604 = vset.pattern.permute.xlu0 1
      %605 = vperm.xlu0 %604, %v539
      %v606 = vpop.permute.xlu0 %605
      %v607 = vlaneseq
      %v608 = vand.u32 %v607, 127
      %v609 = vperm.slane %v561, %v608
      %v610 = vadd.s32 %v608, 4294967288
      %v611 = vperm.slane %v564, %v610
      %vm612 = vcmask 130112
      %v613 = vsel %vm612, %v611, %v609
      %v614 = vadd.s32 %v608, 4294967280
      %v615 = vperm.slane %v567, %v614
      %vm616 = vcmask 195712
      %v617 = vsel %vm616, %v615, %v613
      %v618 = vadd.s32 %v608, 4294967272
      %v619 = vperm.slane %v570, %v618
      %vm620 = vcmask 261312
      %v621 = vsel %vm620, %v619, %v617
      %v622 = vperm.slane %v573, %v608
      %v623 = vperm.slane %v576, %v610
      %v624 = vsel %vm612, %v623, %v622
      %v625 = vperm.slane %v579, %v614
      %v626 = vsel %vm616, %v625, %v624
      %v627 = vperm.slane %v582, %v618
      %v628 = vsel %vm620, %v627, %v626
      %v629 = vperm.slane %v585, %v608
      %v630 = vperm.slane %v588, %v610
      %v631 = vsel %vm612, %v630, %v629
      %v632 = vperm.slane %v591, %v614
      %v633 = vsel %vm616, %v632, %v631
      %v634 = vperm.slane %v594, %v618
      %v635 = vsel %vm620, %v634, %v633
      %v636 = vperm.slane %v597, %v608
      %v637 = vperm.slane %v600, %v610
      %v638 = vsel %vm612, %v637, %v636
      %v639 = vperm.slane %v603, %v614
      %v640 = vsel %vm616, %v639, %v638
      %v641 = vperm.slane %v606, %v618
      %v642 = vsel %vm620, %v641, %v640
      %vm643 = vcmask 1041409
      %v644 = vsel %vm643, %v628, %v621
      %vm645 = vcmask 1042434
      %v646 = vsel %vm645, %v635, %v644
      %vm647 = vcmask 1043459
      %v648 = vsel %vm647, %v642, %v646
      %vm649 = vcmask 31744
      %v651 = vsel %vm649, %v542, 0
      %vm653 = vcmask 1043456
      %v654 = vsel %vm653, %v648, 0
      %656 = vmatpush.msra.mxu0 0.0
      %657 = vmatpush.msra.mxu0 0.0
      %658 = vmatpush.msra.mxu0 0.0
      %659 = vmatpush.msra.mxu0 0.0
      %660 = vmatpush.msra.mxu0 0.0
      %661 = vmatpush.msra.mxu0 0.0
      %662 = vmatpush.msra.mxu0 0.0
      %663 = vmatpush.msra.mxu0 0.0
      %664 = vmatpush.msra.mxu0 0.0
      %665 = vmatpush.msra.mxu0 0.0
      %666 = vmatpush.msra.mxu0 0.0
      %667 = vmatpush.msra.mxu0 0.0
      %668 = vmatpush.msra.mxu0 0.0
      %669 = vmatpush.msra.mxu0 0.0
      %670 = vmatpush.msra.mxu0 0.0
      %671 = vmatpush.msra.mxu0 %v654
      %672 = vmatmul.f32.gmra.mxu0 %v651
      %v673 = vpop.f32.mrf.mxu0
      %v674 = vadd.f32 0.0, %v673
      %675 = vdwg.mxu0
      %676 = vset.pattern.permute.xlu0 0
      %677 = vperm.xlu0 %676, %v365
      %v678 = vpop.permute.xlu0 %677
      %679 = vset.pattern.permute.xlu0 0
      %680 = vperm.xlu0 %679, %v421
      %v681 = vpop.permute.xlu0 %680
      %682 = vset.pattern.permute.xlu0 0
      %683 = vperm.xlu0 %682, %v477
      %v684 = vpop.permute.xlu0 %683
      %685 = vset.pattern.permute.xlu0 0
      %686 = vperm.xlu0 %685, %v533
      %v687 = vpop.permute.xlu0 %686
      %688 = vset.pattern.permute.xlu0 0
      %689 = vperm.xlu0 %688, %v367
      %v690 = vpop.permute.xlu0 %689
      %691 = vset.pattern.permute.xlu0 0
      %692 = vperm.xlu0 %691, %v423
      %v693 = vpop.permute.xlu0 %692
      %694 = vset.pattern.permute.xlu0 0
      %695 = vperm.xlu0 %694, %v479
      %v696 = vpop.permute.xlu0 %695
      %697 = vset.pattern.permute.xlu0 0
      %698 = vperm.xlu0 %697, %v535
      %v699 = vpop.permute.xlu0 %698
      %700 = vset.pattern.permute.xlu0 0
      %701 = vperm.xlu0 %700, %v369
      %v702 = vpop.permute.xlu0 %701
      %703 = vset.pattern.permute.xlu0 0
      %704 = vperm.xlu0 %703, %v425
      %v705 = vpop.permute.xlu0 %704
      %706 = vset.pattern.permute.xlu0 0
      %707 = vperm.xlu0 %706, %v481
      %v708 = vpop.permute.xlu0 %707
      %709 = vset.pattern.permute.xlu0 0
      %710 = vperm.xlu0 %709, %v537
      %v711 = vpop.permute.xlu0 %710
      %712 = vset.pattern.permute.xlu0 0
      %713 = vperm.xlu0 %712, %v371
      %v714 = vpop.permute.xlu0 %713
      %715 = vset.pattern.permute.xlu0 0
      %716 = vperm.xlu0 %715, %v427
      %v717 = vpop.permute.xlu0 %716
      %718 = vset.pattern.permute.xlu0 0
      %719 = vperm.xlu0 %718, %v483
      %v720 = vpop.permute.xlu0 %719
      %721 = vset.pattern.permute.xlu0 0
      %722 = vperm.xlu0 %721, %v539
      %v723 = vpop.permute.xlu0 %722
      %v724 = vperm.slane %v678, %v608
      %v725 = vperm.slane %v681, %v610
      %v726 = vsel %vm612, %v725, %v724
      %v727 = vperm.slane %v684, %v614
      %v728 = vsel %vm616, %v727, %v726
      %v729 = vperm.slane %v687, %v618
      %v730 = vsel %vm620, %v729, %v728
      %v731 = vperm.slane %v690, %v608
      %v732 = vperm.slane %v693, %v610
      %v733 = vsel %vm612, %v732, %v731
      %v734 = vperm.slane %v696, %v614
      %v735 = vsel %vm616, %v734, %v733
      %v736 = vperm.slane %v699, %v618
      %v737 = vsel %vm620, %v736, %v735
      %v738 = vperm.slane %v702, %v608
      %v739 = vperm.slane %v705, %v610
      %v740 = vsel %vm612, %v739, %v738
      %v741 = vperm.slane %v708, %v614
      %v742 = vsel %vm616, %v741, %v740
      %v743 = vperm.slane %v711, %v618
      %v744 = vsel %vm620, %v743, %v742
      %v745 = vperm.slane %v714, %v608
      %v746 = vperm.slane %v717, %v610
      %v747 = vsel %vm612, %v746, %v745
      %v748 = vperm.slane %v720, %v614
      %v749 = vsel %vm616, %v748, %v747
      %v750 = vperm.slane %v723, %v618
      %v751 = vsel %vm620, %v750, %v749
      %v752 = vsel %vm643, %v737, %v730
      %v753 = vsel %vm645, %v744, %v752
      %v754 = vsel %vm647, %v751, %v753
      %v756 = vsel %vm649, %v540, 0
      %v758 = vsel %vm653, %v754, 0
      %760 = vmatpush.msra.mxu0 0.0
      %761 = vmatpush.msra.mxu0 0.0
      %762 = vmatpush.msra.mxu0 0.0
      %763 = vmatpush.msra.mxu0 0.0
      %764 = vmatpush.msra.mxu0 0.0
      %765 = vmatpush.msra.mxu0 0.0
      %766 = vmatpush.msra.mxu0 0.0
      %767 = vmatpush.msra.mxu0 0.0
      %768 = vmatpush.msra.mxu0 0.0
      %769 = vmatpush.msra.mxu0 0.0
      %770 = vmatpush.msra.mxu0 0.0
      %771 = vmatpush.msra.mxu0 0.0
      %772 = vmatpush.msra.mxu0 0.0
      %773 = vmatpush.msra.mxu0 0.0
      %774 = vmatpush.msra.mxu0 0.0
      %775 = vmatpush.msra.mxu0 %v758
      %776 = vmatmul.f32.gmra.mxu0 %v756
      %v777 = vpop.f32.mrf.mxu0
      %v778 = vadd.f32 %v674, %v777
      %779 = vdwg.mxu0
      %s780 = scalar_lea.vmem %s1, 16
      %v781 = vld [vmem:[%s780] sm:$0xff]
      %v782 = vadd.s32 %v608, 1
      %v783 = vperm.slane %v678, %v782
      %v784 = vadd.s32 %v608, 4294967289
      %v785 = vperm.slane %v681, %v784
      %vm786 = vcmask 121912
      %v787 = vsel %vm786, %v785, %v783
      %v788 = vadd.s32 %v608, 4294967281
      %v789 = vperm.slane %v684, %v788
      %vm790 = vcmask 187512
      %v791 = vsel %vm790, %v789, %v787
      %v792 = vadd.s32 %v608, 4294967273
      %v793 = vperm.slane %v687, %v792
      %vm794 = vcmask 253112
      %v795 = vsel %vm794, %v793, %v791
      %v796 = vperm.slane %v690, %v782
      %v797 = vperm.slane %v693, %v784
      %v798 = vsel %vm786, %v797, %v796
      %v799 = vperm.slane %v696, %v788
      %v800 = vsel %vm790, %v799, %v798
      %v801 = vperm.slane %v699, %v792
      %v802 = vsel %vm794, %v801, %v800
      %v803 = vperm.slane %v702, %v782
      %v804 = vperm.slane %v705, %v784
      %v805 = vsel %vm786, %v804, %v803
      %v806 = vperm.slane %v708, %v788
      %v807 = vsel %vm790, %v806, %v805
      %v808 = vperm.slane %v711, %v792
      %v809 = vsel %vm794, %v808, %v807
      %v810 = vperm.slane %v714, %v782
      %v811 = vperm.slane %v717, %v784
      %v812 = vsel %vm786, %v811, %v810
      %v813 = vperm.slane %v720, %v788
      %v814 = vsel %vm790, %v813, %v812
      %v815 = vperm.slane %v723, %v792
      %v816 = vsel %vm794, %v815, %v814
      %v817 = vsel %vm643, %v802, %v795
      %v818 = vsel %vm645, %v809, %v817
      %v819 = vsel %vm647, %v816, %v818
      %v821 = vsel %vm649, %v781, 0
      %v823 = vsel %vm653, %v819, 0
      %825 = vmatpush.msra.mxu0 0.0
      %826 = vmatpush.msra.mxu0 0.0
      %827 = vmatpush.msra.mxu0 0.0
      %828 = vmatpush.msra.mxu0 0.0
      %829 = vmatpush.msra.mxu0 0.0
      %830 = vmatpush.msra.mxu0 0.0
      %831 = vmatpush.msra.mxu0 0.0
      %832 = vmatpush.msra.mxu0 0.0
      %833 = vmatpush.msra.mxu0 0.0
      %834 = vmatpush.msra.mxu0 0.0
      %835 = vmatpush.msra.mxu0 0.0
      %836 = vmatpush.msra.mxu0 0.0
      %837 = vmatpush.msra.mxu0 0.0
      %838 = vmatpush.msra.mxu0 0.0
      %839 = vmatpush.msra.mxu0 0.0
      %840 = vmatpush.msra.mxu0 %v823
      %841 = vmatmul.f32.gmra.mxu0 %v821
      %v842 = vpop.f32.mrf.mxu0
      %v843 = vadd.f32 0.0, %v842
      %844 = vdwg.mxu0
      %v845 = vadd.f32 %v778, %v843
      %v846 = vld [vmem:[%s2] sm:$0xff]
      %848 = vset.pattern.permute.xlu0 0
      %849 = vperm.xlu0 %848, %v846
      %v850 = vpop.permute.xlu0 %849
      %v852 = vadd.f32 %v845, %v850
      %v853 = vmax.f32 %v852, 0.0
      %vm854 = vcmask 261368
      %855 = vst.msk [vmem:[#allocation2] sm:$0xff] %vm854, 0.0
      %vm856 = vcmask 252928
      %857 = vst.msk [vmem:[#allocation2] sm:$0xff] %vm856, %v853
      %v858 = vld [vmem:[#allocation2] sm:$0xff]
      %860 = vrot.lane.b32.xlu0 %v858, 126
      %v861 = vpop.permute.xlu0 %860
      %863 = vrot.lane.b32.xlu0 %v858, 124
      %v864 = vpop.permute.xlu0 %863
      %866 = vrot.lane.b32.xlu0 %v858, 122
      %v867 = vpop.permute.xlu0 %866
      %869 = vrot.lane.b32.xlu0 %v858, 120
      %v870 = vpop.permute.xlu0 %869
      %872 = vrot.lane.b32.xlu0 %v858, 118
      %v873 = vpop.permute.xlu0 %872
      %875 = vrot.lane.b32.xlu0 %v858, 116
      %v876 = vpop.permute.xlu0 %875
      %878 = vrot.lane.b32.xlu0 %v858, 114
      %v879 = vpop.permute.xlu0 %878
      %881 = vrot.lane.b32.xlu0 %v858, 112
      %v882 = vpop.permute.xlu0 %881
      %884 = vrot.lane.b32.xlu0 %v858, 110
      %v885 = vpop.permute.xlu0 %884
      %887 = vrot.lane.b32.xlu0 %v858, 108
      %v888 = vpop.permute.xlu0 %887
      %890 = vrot.lane.b32.xlu0 %v858, 106
      %v891 = vpop.permute.xlu0 %890
      %893 = vrot.lane.b32.xlu0 %v858, 104
      %v894 = vpop.permute.xlu0 %893
      %896 = vrot.lane.b32.xlu0 %v858, 102
      %v897 = vpop.permute.xlu0 %896
      %899 = vrot.lane.b32.xlu0 %v858, 100
      %v900 = vpop.permute.xlu0 %899
      %902 = vrot.lane.b32.xlu0 %v858, 98
      %v903 = vpop.permute.xlu0 %902
      %v905 = vrot.slane %v864, 4
      %v906 = vsel %vm316, %v905, %v858
      %v907 = vrot.slane %v858, 4
      %v908 = vsel %vm316, %v864, %v907
      %v910 = vunpack.c.l.s4 1983009808
      %v911 = vunpack.c.0.s8 %v910
      %v912 = vperm.slane %v906, %v911
      %v914 = vunpack.c.l.s4 1983009808
      %v915 = vunpack.c.0.s8 %v914
      %v916 = vperm.slane %v908, %v915
      %v917 = vrot.slane %v867, 4
      %v918 = vsel %vm316, %v917, %v861
      %v919 = vrot.slane %v861, 4
      %v920 = vsel %vm316, %v867, %v919
      %v922 = vunpack.c.l.s4 1983009808
      %v923 = vunpack.c.0.s8 %v922
      %v924 = vperm.slane %v918, %v923
      %v926 = vunpack.c.l.s4 1983009808
      %v927 = vunpack.c.0.s8 %v926
      %v928 = vperm.slane %v920, %v927
      %v929 = vrot.slane %v876, 4
      %v930 = vsel %vm316, %v929, %v870
      %v931 = vrot.slane %v870, 4
      %v932 = vsel %vm316, %v876, %v931
      %v934 = vunpack.c.l.s4 1983009808
      %v935 = vunpack.c.0.s8 %v934
      %v936 = vperm.slane %v930, %v935
      %v938 = vunpack.c.l.s4 1983009808
      %v939 = vunpack.c.0.s8 %v938
      %v940 = vperm.slane %v932, %v939
      %v941 = vrot.slane %v879, 4
      %v942 = vsel %vm316, %v941, %v873
      %v943 = vrot.slane %v873, 4
      %v944 = vsel %vm316, %v879, %v943
      %v946 = vunpack.c.l.s4 1983009808
      %v947 = vunpack.c.0.s8 %v946
      %v948 = vperm.slane %v942, %v947
      %v950 = vunpack.c.l.s4 1983009808
      %v951 = vunpack.c.0.s8 %v950
      %v952 = vperm.slane %v944, %v951
      %v953 = vrot.slane %v924, 4
      %v954 = vsel %vm316, %v953, %v912
      %v955 = vrot.slane %v912, 4
      %v956 = vsel %vm316, %v924, %v955
      %v958 = vunpack.c.l.s4 1934713408
      %v959 = vunpack.c.0.s8 %v958
      %v960 = vperm.slane %v954, %v959
      %v962 = vunpack.c.l.s4 1934713408
      %v963 = vunpack.c.0.s8 %v962
      %v964 = vperm.slane %v956, %v963
      %v965 = vrot.slane %v928, 4
      %v966 = vsel %vm316, %v965, %v916
      %v967 = vrot.slane %v916, 4
      %v968 = vsel %vm316, %v928, %v967
      %v970 = vunpack.c.l.s4 1934713408
      %v971 = vunpack.c.0.s8 %v970
      %v972 = vperm.slane %v966, %v971
      %v974 = vunpack.c.l.s4 1934713408
      %v975 = vunpack.c.0.s8 %v974
      %v976 = vperm.slane %v968, %v975
      %v977 = vrot.slane %v948, 4
      %v978 = vsel %vm316, %v977, %v936
      %v979 = vrot.slane %v936, 4
      %v980 = vsel %vm316, %v948, %v979
      %v982 = vunpack.c.l.s4 1934713408
      %v983 = vunpack.c.0.s8 %v982
      %v984 = vperm.slane %v978, %v983
      %v986 = vunpack.c.l.s4 1934713408
      %v987 = vunpack.c.0.s8 %v986
      %v988 = vperm.slane %v980, %v987
      %v989 = vrot.slane %v952, 4
      %v990 = vsel %vm316, %v989, %v940
      %v991 = vrot.slane %v940, 4
      %v992 = vsel %vm316, %v952, %v991
      %v994 = vunpack.c.l.s4 1934713408
      %v995 = vunpack.c.0.s8 %v994
      %v996 = vperm.slane %v990, %v995
      %v998 = vunpack.c.l.s4 1934713408
      %v999 = vunpack.c.0.s8 %v998
      %v1000 = vperm.slane %v992, %v999
      %v1001 = vrot.slane %v984, 4
      %v1002 = vsel %vm316, %v1001, %v960
      %v1003 = vrot.slane %v960, 4
      %v1004 = vsel %vm316, %v984, %v1003
      %v1005 = vrot.slane %v988, 4
      %v1006 = vsel %vm316, %v1005, %v964
      %v1007 = vrot.slane %v964, 4
      %v1008 = vsel %vm316, %v988, %v1007
      %v1009 = vrot.slane %v996, 4
      %v1010 = vsel %vm316, %v1009, %v972
      %v1011 = vrot.slane %v972, 4
      %v1012 = vsel %vm316, %v996, %v1011
      %v1013 = vrot.slane %v1000, 4
      %v1014 = vsel %vm316, %v1013, %v976
      %v1015 = vrot.slane %v976, 4
      %v1016 = vsel %vm316, %v1000, %v1015
      %v1017 = vrot.slane %v888, 4
      %v1018 = vsel %vm316, %v1017, %v882
      %v1019 = vrot.slane %v882, 4
      %v1020 = vsel %vm316, %v888, %v1019
      %v1022 = vunpack.c.l.s4 1983009808
      %v1023 = vunpack.c.0.s8 %v1022
      %v1024 = vperm.slane %v1018, %v1023
      %v1026 = vunpack.c.l.s4 1983009808
      %v1027 = vunpack.c.0.s8 %v1026
      %v1028 = vperm.slane %v1020, %v1027
      %v1029 = vrot.slane %v891, 4
      %v1030 = vsel %vm316, %v1029, %v885
      %v1031 = vrot.slane %v885, 4
      %v1032 = vsel %vm316, %v891, %v1031
      %v1034 = vunpack.c.l.s4 1983009808
      %v1035 = vunpack.c.0.s8 %v1034
      %v1036 = vperm.slane %v1030, %v1035
      %v1038 = vunpack.c.l.s4 1983009808
      %v1039 = vunpack.c.0.s8 %v1038
      %v1040 = vperm.slane %v1032, %v1039
      %v1041 = vrot.slane %v900, 4
      %v1042 = vsel %vm316, %v1041, %v894
      %v1043 = vrot.slane %v894, 4
      %v1044 = vsel %vm316, %v900, %v1043
      %v1046 = vunpack.c.l.s4 1983009808
      %v1047 = vunpack.c.0.s8 %v1046
      %v1048 = vperm.slane %v1042, %v1047
      %v1050 = vunpack.c.l.s4 1983009808
      %v1051 = vunpack.c.0.s8 %v1050
      %v1052 = vperm.slane %v1044, %v1051
      %v1053 = vrot.slane %v903, 4
      %v1054 = vsel %vm316, %v1053, %v897
      %v1055 = vrot.slane %v897, 4
      %v1056 = vsel %vm316, %v903, %v1055
      %v1058 = vunpack.c.l.s4 1983009808
      %v1059 = vunpack.c.0.s8 %v1058
      %v1060 = vperm.slane %v1054, %v1059
      %v1062 = vunpack.c.l.s4 1983009808
      %v1063 = vunpack.c.0.s8 %v1062
      %v1064 = vperm.slane %v1056, %v1063
      %v1065 = vrot.slane %v1036, 4
      %v1066 = vsel %vm316, %v1065, %v1024
      %v1067 = vrot.slane %v1024, 4
      %v1068 = vsel %vm316, %v1036, %v1067
      %v1070 = vunpack.c.l.s4 1934713408
      %v1071 = vunpack.c.0.s8 %v1070
      %v1072 = vperm.slane %v1066, %v1071
      %v1074 = vunpack.c.l.s4 1934713408
      %v1075 = vunpack.c.0.s8 %v1074
      %v1076 = vperm.slane %v1068, %v1075
      %v1077 = vrot.slane %v1040, 4
      %v1078 = vsel %vm316, %v1077, %v1028
      %v1079 = vrot.slane %v1028, 4
      %v1080 = vsel %vm316, %v1040, %v1079
      %v1082 = vunpack.c.l.s4 1934713408
      %v1083 = vunpack.c.0.s8 %v1082
      %v1084 = vperm.slane %v1078, %v1083
      %v1086 = vunpack.c.l.s4 1934713408
      %v1087 = vunpack.c.0.s8 %v1086
      %v1088 = vperm.slane %v1080, %v1087
      %v1089 = vrot.slane %v1060, 4
      %v1090 = vsel %vm316, %v1089, %v1048
      %v1091 = vrot.slane %v1048, 4
      %v1092 = vsel %vm316, %v1060, %v1091
      %v1094 = vunpack.c.l.s4 1934713408
      %v1095 = vunpack.c.0.s8 %v1094
      %v1096 = vperm.slane %v1090, %v1095
      %v1098 = vunpack.c.l.s4 1934713408
      %v1099 = vunpack.c.0.s8 %v1098
      %v1100 = vperm.slane %v1092, %v1099
      %v1101 = vrot.slane %v1064, 4
      %v1102 = vsel %vm316, %v1101, %v1052
      %v1103 = vrot.slane %v1052, 4
      %v1104 = vsel %vm316, %v1064, %v1103
      %v1106 = vunpack.c.l.s4 1934713408
      %v1107 = vunpack.c.0.s8 %v1106
      %v1108 = vperm.slane %v1102, %v1107
      %v1110 = vunpack.c.l.s4 1934713408
      %v1111 = vunpack.c.0.s8 %v1110
      %v1112 = vperm.slane %v1104, %v1111
      %v1113 = vrot.slane %v1096, 4
      %v1114 = vsel %vm316, %v1113, %v1072
      %v1115 = vrot.slane %v1072, 4
      %v1116 = vsel %vm316, %v1096, %v1115
      %v1117 = vrot.slane %v1100, 4
      %v1118 = vsel %vm316, %v1117, %v1076
      %v1119 = vrot.slane %v1076, 4
      %v1120 = vsel %vm316, %v1100, %v1119
      %v1121 = vrot.slane %v1108, 4
      %v1122 = vsel %vm316, %v1121, %v1084
      %v1123 = vrot.slane %v1084, 4
      %v1124 = vsel %vm316, %v1108, %v1123
      %v1125 = vrot.slane %v1112, 4
      %v1126 = vsel %vm316, %v1125, %v1088
      %v1127 = vrot.slane %v1088, 4
      %v1128 = vsel %vm316, %v1112, %v1127
      %v1129 = vld [vmem:[%s3] sm:$0xff]
      %s1130 = scalar_lea.vmem %s3, 8
      %v1131 = vld [vmem:[%s1130] sm:$0xff]
      %1148 = vset.pattern.permute.xlu0 1
      %1149 = vperm.xlu0 %1148, %v1002
      %v1150 = vpop.permute.xlu0 %1149
      %1151 = vset.pattern.permute.xlu0 1
      %1152 = vperm.xlu0 %1151, %v1114
      %v1153 = vpop.permute.xlu0 %1152
      %1154 = vset.pattern.permute.xlu0 1
      %1155 = vperm.xlu0 %1154, %v1004
      %v1156 = vpop.permute.xlu0 %1155
      %1157 = vset.pattern.permute.xlu0 1
      %1158 = vperm.xlu0 %1157, %v1116
      %v1159 = vpop.permute.xlu0 %1158
      %1160 = vset.pattern.permute.xlu0 1
      %1161 = vperm.xlu0 %1160, %v1006
      %v1162 = vpop.permute.xlu0 %1161
      %1163 = vset.pattern.permute.xlu0 1
      %1164 = vperm.xlu0 %1163, %v1118
      %v1165 = vpop.permute.xlu0 %1164
      %1166 = vset.pattern.permute.xlu0 1
      %1167 = vperm.xlu0 %1166, %v1008
      %v1168 = vpop.permute.xlu0 %1167
      %1169 = vset.pattern.permute.xlu0 1
      %1170 = vperm.xlu0 %1169, %v1120
      %v1171 = vpop.permute.xlu0 %1170
      %1172 = vset.pattern.permute.xlu0 1
      %1173 = vperm.xlu0 %1172, %v1010
      %v1174 = vpop.permute.xlu0 %1173
      %1175 = vset.pattern.permute.xlu0 1
      %1176 = vperm.xlu0 %1175, %v1122
      %v1177 = vpop.permute.xlu0 %1176
      %1178 = vset.pattern.permute.xlu0 1
      %1179 = vperm.xlu0 %1178, %v1012
      %v1180 = vpop.permute.xlu0 %1179
      %1181 = vset.pattern.permute.xlu0 1
      %1182 = vperm.xlu0 %1181, %v1124
      %v1183 = vpop.permute.xlu0 %1182
      %1184 = vset.pattern.permute.xlu0 1
      %1185 = vperm.xlu0 %1184, %v1014
      %v1186 = vpop.permute.xlu0 %1185
      %1187 = vset.pattern.permute.xlu0 1
      %1188 = vperm.xlu0 %1187, %v1126
      %v1189 = vpop.permute.xlu0 %1188
      %1190 = vset.pattern.permute.xlu0 1
      %1191 = vperm.xlu0 %1190, %v1016
      %v1192 = vpop.permute.xlu0 %1191
      %1193 = vset.pattern.permute.xlu0 1
      %1194 = vperm.xlu0 %1193, %v1128
      %v1195 = vpop.permute.xlu0 %1194
      %v1196 = vperm.slane %v1150, %v608
      %v1197 = vperm.slane %v1153, %v610
      %v1198 = vsel %vm612, %v1197, %v1196
      %v1199 = vperm.slane %v1156, %v608
      %v1200 = vperm.slane %v1159, %v610
      %v1201 = vsel %vm612, %v1200, %v1199
      %v1202 = vperm.slane %v1162, %v608
      %v1203 = vperm.slane %v1165, %v610
      %v1204 = vsel %vm612, %v1203, %v1202
      %v1205 = vperm.slane %v1168, %v608
      %v1206 = vperm.slane %v1171, %v610
      %v1207 = vsel %vm612, %v1206, %v1205
      %v1208 = vperm.slane %v1174, %v608
      %v1209 = vperm.slane %v1177, %v610
      %v1210 = vsel %vm612, %v1209, %v1208
      %v1211 = vperm.slane %v1180, %v608
      %v1212 = vperm.slane %v1183, %v610
      %v1213 = vsel %vm612, %v1212, %v1211
      %v1214 = vperm.slane %v1186, %v608
      %v1215 = vperm.slane %v1189, %v610
      %v1216 = vsel %vm612, %v1215, %v1214
      %v1217 = vperm.slane %v1192, %v608
      %v1218 = vperm.slane %v1195, %v610
      %v1219 = vsel %vm612, %v1218, %v1217
      %v1220 = vsel %vm643, %v1201, %v1198
      %v1221 = vsel %vm645, %v1204, %v1220
      %v1222 = vsel %vm647, %v1207, %v1221
      %vm1223 = vcmask 1044484
      %v1224 = vsel %vm1223, %v1210, %v1222
      %vm1225 = vcmask 1045509
      %v1226 = vsel %vm1225, %v1213, %v1224
      %vm1227 = vcmask 1046534
      %v1228 = vsel %vm1227, %v1216, %v1226
      %vm1229 = vcmask 1047559
      %v1230 = vsel %vm1229, %v1219, %v1228
      %vm1232 = vcmask 64512
      %v1234 = vsel %vm1232, %v1131, 0
      %1236 = vmatpush.msra.mxu0 0.0
      %1237 = vmatpush.msra.mxu0 0.0
      %1238 = vmatpush.msra.mxu0 0.0
      %1239 = vmatpush.msra.mxu0 0.0
      %1240 = vmatpush.msra.mxu0 0.0
      %1241 = vmatpush.msra.mxu0 0.0
      %1242 = vmatpush.msra.mxu0 0.0
      %1243 = vmatpush.msra.mxu0 0.0
      %1244 = vmatpush.msra.mxu0 0.0
      %1245 = vmatpush.msra.mxu0 0.0
      %1246 = vmatpush.msra.mxu0 0.0
      %1247 = vmatpush.msra.mxu0 0.0
      %1248 = vmatpush.msra.mxu0 0.0
      %1249 = vmatpush.msra.mxu0 0.0
      %1250 = vmatpush.msra.mxu0 0.0
      %1251 = vmatpush.msra.mxu0 %v1230
      %1252 = vmatmul.f32.gmra.mxu0 %v1234
      %v1253 = vpop.f32.mrf.mxu0
      %v1254 = vadd.f32 0.0, %v1253
      %1255 = vdwg.mxu0
      %1256 = vset.pattern.permute.xlu0 0
      %1257 = vperm.xlu0 %1256, %v1002
      %v1258 = vpop.permute.xlu0 %1257
      %1259 = vset.pattern.permute.xlu0 0
      %1260 = vperm.xlu0 %1259, %v1114
      %v1261 = vpop.permute.xlu0 %1260
      %1262 = vset.pattern.permute.xlu0 0
      %1263 = vperm.xlu0 %1262, %v1004
      %v1264 = vpop.permute.xlu0 %1263
      %1265 = vset.pattern.permute.xlu0 0
      %1266 = vperm.xlu0 %1265, %v1116
      %v1267 = vpop.permute.xlu0 %1266
      %1268 = vset.pattern.permute.xlu0 0
      %1269 = vperm.xlu0 %1268, %v1006
      %v1270 = vpop.permute.xlu0 %1269
      %1271 = vset.pattern.permute.xlu0 0
      %1272 = vperm.xlu0 %1271, %v1118
      %v1273 = vpop.permute.xlu0 %1272
      %1274 = vset.pattern.permute.xlu0 0
      %1275 = vperm.xlu0 %1274, %v1008
      %v1276 = vpop.permute.xlu0 %1275
      %1277 = vset.pattern.permute.xlu0 0
      %1278 = vperm.xlu0 %1277, %v1120
      %v1279 = vpop.permute.xlu0 %1278
      %1280 = vset.pattern.permute.xlu0 0
      %1281 = vperm.xlu0 %1280, %v1010
      %v1282 = vpop.permute.xlu0 %1281
      %1283 = vset.pattern.permute.xlu0 0
      %1284 = vperm.xlu0 %1283, %v1122
      %v1285 = vpop.permute.xlu0 %1284
      %1286 = vset.pattern.permute.xlu0 0
      %1287 = vperm.xlu0 %1286, %v1012
      %v1288 = vpop.permute.xlu0 %1287
      %1289 = vset.pattern.permute.xlu0 0
      %1290 = vperm.xlu0 %1289, %v1124
      %v1291 = vpop.permute.xlu0 %1290
      %1292 = vset.pattern.permute.xlu0 0
      %1293 = vperm.xlu0 %1292, %v1014
      %v1294 = vpop.permute.xlu0 %1293
      %1295 = vset.pattern.permute.xlu0 0
      %1296 = vperm.xlu0 %1295, %v1126
      %v1297 = vpop.permute.xlu0 %1296
      %1298 = vset.pattern.permute.xlu0 0
      %1299 = vperm.xlu0 %1298, %v1016
      %v1300 = vpop.permute.xlu0 %1299
      %1301 = vset.pattern.permute.xlu0 0
      %1302 = vperm.xlu0 %1301, %v1128
      %v1303 = vpop.permute.xlu0 %1302
      %v1304 = vperm.slane %v1258, %v608
      %v1305 = vperm.slane %v1261, %v610
      %v1306 = vsel %vm612, %v1305, %v1304
      %v1307 = vperm.slane %v1264, %v608
      %v1308 = vperm.slane %v1267, %v610
      %v1309 = vsel %vm612, %v1308, %v1307
      %v1310 = vperm.slane %v1270, %v608
      %v1311 = vperm.slane %v1273, %v610
      %v1312 = vsel %vm612, %v1311, %v1310
      %v1313 = vperm.slane %v1276, %v608
      %v1314 = vperm.slane %v1279, %v610
      %v1315 = vsel %vm612, %v1314, %v1313
      %v1316 = vperm.slane %v1282, %v608
      %v1317 = vperm.slane %v1285, %v610
      %v1318 = vsel %vm612, %v1317, %v1316
      %v1319 = vperm.slane %v1288, %v608
      %v1320 = vperm.slane %v1291, %v610
      %v1321 = vsel %vm612, %v1320, %v1319
      %v1322 = vperm.slane %v1294, %v608
      %v1323 = vperm.slane %v1297, %v610
      %v1324 = vsel %vm612, %v1323, %v1322
      %v1325 = vperm.slane %v1300, %v608
      %v1326 = vperm.slane %v1303, %v610
      %v1327 = vsel %vm612, %v1326, %v1325
      %v1328 = vsel %vm643, %v1309, %v1306
      %v1329 = vsel %vm645, %v1312, %v1328
      %v1330 = vsel %vm647, %v1315, %v1329
      %v1331 = vsel %vm1223, %v1318, %v1330
      %v1332 = vsel %vm1225, %v1321, %v1331
      %v1333 = vsel %vm1227, %v1324, %v1332
      %v1334 = vsel %vm1229, %v1327, %v1333
      %v1337 = vsel %vm1232, %v1129, 0
      %1339 = vmatpush.msra.mxu0 0.0
      %1340 = vmatpush.msra.mxu0 0.0
      %1341 = vmatpush.msra.mxu0 0.0
      %1342 = vmatpush.msra.mxu0 0.0
      %1343 = vmatpush.msra.mxu0 0.0
      %1344 = vmatpush.msra.mxu0 0.0
      %1345 = vmatpush.msra.mxu0 0.0
      %1346 = vmatpush.msra.mxu0 0.0
      %1347 = vmatpush.msra.mxu0 0.0
      %1348 = vmatpush.msra.mxu0 0.0
      %1349 = vmatpush.msra.mxu0 0.0
      %1350 = vmatpush.msra.mxu0 0.0
      %1351 = vmatpush.msra.mxu0 0.0
      %1352 = vmatpush.msra.mxu0 0.0
      %1353 = vmatpush.msra.mxu0 0.0
      %1354 = vmatpush.msra.mxu0 %v1334
      %1355 = vmatmul.f32.gmra.mxu0 %v1337
      %v1356 = vpop.f32.mrf.mxu0
      %v1357 = vadd.f32 %v1254, %v1356
      %1358 = vdwg.mxu0
      %s1359 = scalar_lea.vmem %s3, 16
      %v1360 = vld [vmem:[%s1359] sm:$0xff]
      %v1361 = vperm.slane %v1258, %v782
      %v1362 = vperm.slane %v1261, %v784
      %v1363 = vsel %vm786, %v1362, %v1361
      %v1364 = vperm.slane %v1264, %v782
      %v1365 = vperm.slane %v1267, %v784
      %v1366 = vsel %vm786, %v1365, %v1364
      %v1367 = vperm.slane %v1270, %v782
      %v1368 = vperm.slane %v1273, %v784
      %v1369 = vsel %vm786, %v1368, %v1367
      %v1370 = vperm.slane %v1276, %v782
      %v1371 = vperm.slane %v1279, %v784
      %v1372 = vsel %vm786, %v1371, %v1370
      %v1373 = vperm.slane %v1282, %v782
      %v1374 = vperm.slane %v1285, %v784
      %v1375 = vsel %vm786, %v1374, %v1373
      %v1376 = vperm.slane %v1288, %v782
      %v1377 = vperm.slane %v1291, %v784
      %v1378 = vsel %vm786, %v1377, %v1376
      %v1379 = vperm.slane %v1294, %v782
      %v1380 = vperm.slane %v1297, %v784
      %v1381 = vsel %vm786, %v1380, %v1379
      %v1382 = vperm.slane %v1300, %v782
      %v1383 = vperm.slane %v1303, %v784
      %v1384 = vsel %vm786, %v1383, %v1382
      %v1385 = vsel %vm643, %v1366, %v1363
      %v1386 = vsel %vm645, %v1369, %v1385
      %v1387 = vsel %vm647, %v1372, %v1386
      %v1388 = vsel %vm1223, %v1375, %v1387
      %v1389 = vsel %vm1225, %v1378, %v1388
      %v1390 = vsel %vm1227, %v1381, %v1389
      %v1391 = vsel %vm1229, %v1384, %v1390
      %v1394 = vsel %vm1232, %v1360, 0
      %1396 = vmatpush.msra.mxu0 0.0
      %1397 = vmatpush.msra.mxu0 0.0
      %1398 = vmatpush.msra.mxu0 0.0
      %1399 = vmatpush.msra.mxu0 0.0
      %1400 = vmatpush.msra.mxu0 0.0
      %1401 = vmatpush.msra.mxu0 0.0
      %1402 = vmatpush.msra.mxu0 0.0
      %1403 = vmatpush.msra.mxu0 0.0
      %1404 = vmatpush.msra.mxu0 0.0
      %1405 = vmatpush.msra.mxu0 0.0
      %1406 = vmatpush.msra.mxu0 0.0
      %1407 = vmatpush.msra.mxu0 0.0
      %1408 = vmatpush.msra.mxu0 0.0
      %1409 = vmatpush.msra.mxu0 0.0
      %1410 = vmatpush.msra.mxu0 0.0
      %1411 = vmatpush.msra.mxu0 %v1391
      %1412 = vmatmul.f32.gmra.mxu0 %v1394
      %v1413 = vpop.f32.mrf.mxu0
      %v1414 = vadd.f32 0.0, %v1413
      %1415 = vdwg.mxu0
      %v1416 = vadd.f32 %v1357, %v1414
      %v1417 = vld [vmem:[%s4] sm:$0xff]
      %1419 = vset.pattern.permute.xlu0 0
      %1420 = vperm.xlu0 %1419, %v1417
      %v1421 = vpop.permute.xlu0 %1420
      %v1423 = vadd.f32 %v1416, %v1421
      %v1424 = vmax.f32 %v1423, 0.0
      %1426 = vrot.lane.b32.xlu0 %v1424, 126
      %v1427 = vpop.permute.xlu0 %1426
      %1429 = vrot.lane.b32.xlu0 %v1424, 124
      %v1430 = vpop.permute.xlu0 %1429
      %1432 = vrot.lane.b32.xlu0 %v1424, 122
      %v1433 = vpop.permute.xlu0 %1432
      %1435 = vrot.lane.b32.xlu0 %v1424, 120
      %v1436 = vpop.permute.xlu0 %1435
      %1438 = vrot.lane.b32.xlu0 %v1424, 118
      %v1439 = vpop.permute.xlu0 %1438
      %1441 = vrot.lane.b32.xlu0 %v1424, 116
      %v1442 = vpop.permute.xlu0 %1441
      %v1444 = vrot.slane %v1430, 4
      %v1445 = vsel %vm316, %v1444, %v1424
      %v1446 = vrot.slane %v1424, 4
      %v1447 = vsel %vm316, %v1430, %v1446
      %v1449 = vunpack.c.l.s4 1983009808
      %v1450 = vunpack.c.0.s8 %v1449
      %v1451 = vperm.slane %v1445, %v1450
      %v1453 = vunpack.c.l.s4 1983009808
      %v1454 = vunpack.c.0.s8 %v1453
      %v1455 = vperm.slane %v1447, %v1454
      %v1456 = vrot.slane %v1433, 4
      %v1457 = vsel %vm316, %v1456, %v1427
      %v1458 = vrot.slane %v1427, 4
      %v1459 = vsel %vm316, %v1433, %v1458
      %v1461 = vunpack.c.l.s4 1983009808
      %v1462 = vunpack.c.0.s8 %v1461
      %v1463 = vperm.slane %v1457, %v1462
      %v1465 = vunpack.c.l.s4 1983009808
      %v1466 = vunpack.c.0.s8 %v1465
      %v1467 = vperm.slane %v1459, %v1466
      %v1468 = vrot.slane %v1442, 4
      %v1469 = vsel %vm316, %v1468, %v1436
      %v1470 = vrot.slane %v1436, 4
      %v1471 = vsel %vm316, %v1442, %v1470
      %v1473 = vunpack.c.l.s4 1983009808
      %v1474 = vunpack.c.0.s8 %v1473
      %v1475 = vperm.slane %v1469, %v1474
      %v1477 = vunpack.c.l.s4 1983009808
      %v1478 = vunpack.c.0.s8 %v1477
      %v1479 = vperm.slane %v1471, %v1478
      %v1480 = vrot.slane %v1439, 4
      %v1481 = vsel %vm316, 0.0, %v1480
      %v1483 = vunpack.c.l.s4 1983009808
      %v1484 = vunpack.c.0.s8 %v1483
      %v1485 = vperm.slane %v1439, %v1484
      %v1487 = vunpack.c.l.s4 1983009808
      %v1488 = vunpack.c.0.s8 %v1487
      %v1489 = vperm.slane %v1481, %v1488
      %v1490 = vrot.slane %v1463, 4
      %v1491 = vsel %vm316, %v1490, %v1451
      %v1492 = vrot.slane %v1451, 4
      %v1493 = vsel %vm316, %v1463, %v1492
      %v1495 = vunpack.c.l.s4 1934713408
      %v1496 = vunpack.c.0.s8 %v1495
      %v1497 = vperm.slane %v1491, %v1496
      %v1499 = vunpack.c.l.s4 1934713408
      %v1500 = vunpack.c.0.s8 %v1499
      %v1501 = vperm.slane %v1493, %v1500
      %v1502 = vrot.slane %v1467, 4
      %v1503 = vsel %vm316, %v1502, %v1455
      %v1504 = vrot.slane %v1455, 4
      %v1505 = vsel %vm316, %v1467, %v1504
      %v1507 = vunpack.c.l.s4 1934713408
      %v1508 = vunpack.c.0.s8 %v1507
      %v1509 = vperm.slane %v1503, %v1508
      %v1511 = vunpack.c.l.s4 1934713408
      %v1512 = vunpack.c.0.s8 %v1511
      %v1513 = vperm.slane %v1505, %v1512
      %v1514 = vrot.slane %v1485, 4
      %v1515 = vsel %vm316, %v1514, %v1475
      %v1516 = vrot.slane %v1475, 4
      %v1517 = vsel %vm316, %v1485, %v1516
      %v1519 = vunpack.c.l.s4 1934713408
      %v1520 = vunpack.c.0.s8 %v1519
      %v1521 = vperm.slane %v1515, %v1520
      %v1523 = vunpack.c.l.s4 1934713408
      %v1524 = vunpack.c.0.s8 %v1523
      %v1525 = vperm.slane %v1517, %v1524
      %v1526 = vrot.slane %v1489, 4
      %v1527 = vsel %vm316, %v1526, %v1479
      %v1528 = vrot.slane %v1479, 4
      %v1529 = vsel %vm316, %v1489, %v1528
      %v1531 = vunpack.c.l.s4 1934713408
      %v1532 = vunpack.c.0.s8 %v1531
      %v1533 = vperm.slane %v1527, %v1532
      %v1535 = vunpack.c.l.s4 1934713408
      %v1536 = vunpack.c.0.s8 %v1535
      %v1537 = vperm.slane %v1529, %v1536
      %v1538 = vrot.slane %v1521, 4
      %v1539 = vsel %vm316, %v1538, %v1497
      %v1540 = vrot.slane %v1497, 4
      %v1541 = vsel %vm316, %v1521, %v1540
      %v1542 = vrot.slane %v1525, 4
      %v1543 = vsel %vm316, %v1542, %v1501
      %v1544 = vrot.slane %v1501, 4
      %v1545 = vsel %vm316, %v1525, %v1544
      %v1546 = vrot.slane %v1533, 4
      %v1547 = vsel %vm316, %v1546, %v1509
      %v1548 = vrot.slane %v1509, 4
      %v1549 = vsel %vm316, %v1533, %v1548
      %v1550 = vrot.slane %v1537, 4
      %v1551 = vsel %vm316, %v1550, %v1513
      %v1552 = vrot.slane %v1513, 4
      %v1553 = vsel %vm316, %v1537, %v1552
      %vm1554 = vcmask 14336
      %v1555 = vsel %vm1554, %v1539, -inf
      %1556 = vmax.xlane.f32.xlu0 %v1555
      %v1557 = vpop.xlane.xlu0 %1556
      %v1558 = vsel %vm1554, %v1541, -inf
      %1559 = vmax.xlane.f32.xlu0 %v1558
      %v1560 = vpop.xlane.xlu0 %1559
      %v1561 = vsel %vm1554, %v1543, -inf
      %1562 = vmax.xlane.f32.xlu0 %v1561
      %v1563 = vpop.xlane.xlu0 %1562
      %v1564 = vsel %vm1554, %v1545, -inf
      %1565 = vmax.xlane.f32.xlu0 %v1564
      %v1566 = vpop.xlane.xlu0 %1565
      %v1567 = vsel %vm1554, %v1547, -inf
      %1568 = vmax.xlane.f32.xlu0 %v1567
      %v1569 = vpop.xlane.xlu0 %1568
      %v1570 = vsel %vm1554, %v1549, -inf
      %1571 = vmax.xlane.f32.xlu0 %v1570
      %v1572 = vpop.xlane.xlu0 %1571
      %v1573 = vsel %vm1554, %v1551, -inf
      %1574 = vmax.xlane.f32.xlu0 %v1573
      %v1575 = vpop.xlane.xlu0 %1574
      %v1576 = vsel %vm1554, %v1553, -inf
      %1577 = vmax.xlane.f32.xlu0 %v1576
      %v1578 = vpop.xlane.xlu0 %1577
      %v1587 = vperm.slane %v1557, %v608
      %v1588 = vperm.slane %v1560, %v608
      %v1589 = vperm.slane %v1563, %v608
      %v1590 = vperm.slane %v1566, %v608
      %v1591 = vperm.slane %v1569, %v608
      %v1592 = vperm.slane %v1572, %v608
      %v1593 = vperm.slane %v1575, %v608
      %v1594 = vperm.slane %v1578, %v608
      %v1595 = vsel %vm643, %v1588, %v1587
      %v1596 = vsel %vm645, %v1589, %v1595
      %v1597 = vsel %vm647, %v1590, %v1596
      %v1598 = vsel %vm1223, %v1591, %v1597
      %v1599 = vsel %vm1225, %v1592, %v1598
      %v1600 = vsel %vm1227, %v1593, %v1599
      %v1601 = vsel %vm1229, %v1594, %v1600
      %vm1603 = vcmask 56320
      %1604 = vst.msk [vmem:[%s219] sm:$0xff] %vm1603, %v1601
      %p1605 = scmp.lt.s32.totalorder %s16, 1
      %s1606 = scalar_select %p1605, %s16, 1
      %s1607 = smul.addr %s1606, 8
      %s1608 = scalar_lea.vmem %s5, %s1607
      // Predicated region
      $region41: #{double_conv_forward.1} parent=39 // pred_check
        %p1609 = pneg %p144
      $region42: #{double_conv_forward.1} parent=39 // pred_check_branch
        %1611 = sbr.rel (%p1609) target = $region44
      $region43: #{double_conv_forward.1} parent=39 // pred_region
        _
      $region44: #{double_conv_forward.1} parent=39 // pred_fallthru
        _
    $region40: #{double_conv_forward.1} parent=5 // pred_fallthru
      _
    %p1612 = scmp.le.s32.totalorder 2, %s11
    // Predicated region
    $region45: #{double_conv_forward.1} parent=5 // pred_check
      %p1613 = pneg %p1612
    $region46: #{double_conv_forward.1} parent=5 // pred_check_branch
      %1615 = sbr.rel (%p1613) target = $region48
    $region47: #{double_conv_forward.1} parent=5 // pred_region
      %s1616 = ssub.s32 %s11, 2
      // Predicated region
      $region49: #{double_conv_forward.1} parent=47 // pred_check
        %p1617 = pneg %p150
      $region50: #{double_conv_forward.1} parent=47 // pred_check_branch
        %1619 = sbr.rel (%p1617) target = $region52
      $region51: #{double_conv_forward.1} parent=47 // pred_region
        %p1620 = scmp.lt.s32.totalorder %s17, 1
        %s1621 = scalar_select %p1620, %s17, 1
        %s1622 = smul.addr %s1621, 8
        %s1623 = scalar_lea.vmem %s5, %s1622
      $region52: #{double_conv_forward.1} parent=47 // pred_fallthru
        _
    $region48: #{double_conv_forward.1} parent=5 // pred_fallthru
      _
  $region6: #{double_conv_forward.1} parent=0 // loop_footer
    %s15 = sadd.s32 1, %s11
  $region7: #{double_conv_forward.1} parent=0 // loop_footer_branch
    %10 = sbr.rel target = $region3
  $region8: #{double_conv_forward.1} parent=0 // loop_exit
    _

</llo_original>
